<compile_context>
chip_gen: v6e
topology: v6e:2x2x1
jax: 0.10.0
libtpu: 0.0.40
codegen_flags: <defaults>
</compile_context>

<pallas_src>
import functools
import math

import jax
import jax.numpy as jnp
from jax.experimental import pallas as pl
from jax.experimental.pallas import tpu as pltpu


def _sdpa_kernel(q_in_ref, k_in_ref, v_in_ref,
                 wq_ref, wk_ref, wv_ref,
                 bq_ref, bk_ref, bv_ref,
                 wo_ref, bo_ref,
                 o_ref, *, b_tile, nq, nk, h, d_k, d_v, d_model):
    # ---- Token-batched input projections (128-wide MXU matmuls, f32 acc) ----
    q_tok = q_in_ref[...].reshape(b_tile * nq, d_model)          # bf16
    k_tok = k_in_ref[...].reshape(b_tile * nk, d_model)
    v_tok = v_in_ref[...].reshape(b_tile * nk, d_model)

    # 1/sqrt(d_k) is pre-folded into wq/bq at parameter-prep time.
    q = jnp.dot(q_tok, wq_ref[...], preferred_element_type=jnp.float32) + bq_ref[...]
    k = jnp.dot(k_tok, wk_ref[...], preferred_element_type=jnp.float32) + bk_ref[...]
    v = jnp.dot(v_tok, wv_ref[...], preferred_element_type=jnp.float32) + bv_ref[...]

    q = q.astype(jnp.bfloat16)
    k = k.astype(jnp.bfloat16)
    v = v.astype(jnp.bfloat16)

    # ---- Per-(batch, head) attention core (small static loops, 2D matmuls) ----
    batch_outs = []
    for b in range(b_tile):
        q_b = q[b * nq:(b + 1) * nq, :]                          # (nq, h*d_k)
        k_b = k[b * nk:(b + 1) * nk, :]                          # (nk, h*d_k)
        v_b = v[b * nk:(b + 1) * nk, :]                          # (nk, h*d_v)
        head_outs = []
        for hh in range(h):
            q_h = q_b[:, hh * d_k:(hh + 1) * d_k]                # (nq, d_k)
            k_h = k_b[:, hh * d_k:(hh + 1) * d_k]                # (nk, d_k)
            v_h = v_b[:, hh * d_v:(hh + 1) * d_v]                # (nk, d_v)

            # logits = (q * scale) @ k^T, contracting d_k (no transpose needed).
            logits = jax.lax.dot_general(
                q_h, k_h, dimension_numbers=(((1,), (1,)), ((), ())),
                preferred_element_type=jnp.float32)              # (nq, nk) f32

            # Numerically stable softmax, f32 math; normalize AFTER the PV matmul.
            logits = logits - jnp.max(logits, axis=-1, keepdims=True)
            p = jnp.exp(logits)
            l = jnp.sum(p, axis=-1, keepdims=True)               # (nq, 1)
            out_h = jnp.dot(p.astype(jnp.bfloat16), v_h,
                            preferred_element_type=jnp.float32)  # (nq, d_v)
            out_h = out_h * pl.reciprocal(l, approx=False)
            head_outs.append(out_h.astype(jnp.bfloat16))
        batch_outs.append(jnp.concatenate(head_outs, axis=-1))   # (nq, h*d_v)
    att_out = jnp.concatenate(batch_outs, axis=0)                # (b_tile*nq, h*d_v)

    # ---- Single fused output projection fc_o + bias ----
    out = jnp.dot(att_out, wo_ref[...],
                  preferred_element_type=jnp.float32) + bo_ref[...]
    o_ref[...] = out.reshape(b_tile, nq, d_model).astype(o_ref.dtype)


def prepare_params(wq, bq, wk, bk, wv, bv, wo, bo, *, d_k):
    """One-time parameter preparation: fold 1/sqrt(d_k) into fc_q, cast weights
    to bf16 (MXU fast path), keep biases in f32 row vectors."""
    scale = 1.0 / math.sqrt(d_k)
    return dict(
        wq=(wq * scale).astype(jnp.bfloat16),
        wk=wk.astype(jnp.bfloat16),
        wv=wv.astype(jnp.bfloat16),
        wo=wo.astype(jnp.bfloat16),
        bq=(bq * scale).reshape(1, -1).astype(jnp.float32),
        bk=bk.reshape(1, -1).astype(jnp.float32),
        bv=bv.reshape(1, -1).astype(jnp.float32),
        bo=bo.reshape(1, -1).astype(jnp.float32),
    )


def _pick_b_tile(b_s, nq):
    """Largest divisor of b_s keeping <=512 token rows per step and >=2 grid
    steps when b_s allows (helps 2-TC chips keep both cores busy)."""
    best = 1
    for cand in range(1, b_s + 1):
        if b_s % cand == 0 and cand * nq <= 512 and (b_s // cand >= 2 or b_s == 1):
            best = cand
    return best


def scaled_dot_product_attention(queries, keys, values, params,
                                 *, h, d_k, d_v, b_tile=None):
    """queries/keys/values: (b, n, d_model) f32.  params from prepare_params().
    Returns (b, nq, d_model) f32."""
    b_s, nq, d_model = queries.shape
    nk = keys.shape[1]
    if b_tile is None:
        b_tile = _pick_b_tile(b_s, nq)
    assert b_s % b_tile == 0

    q_in = queries.astype(jnp.bfloat16)
    k_in = keys.astype(jnp.bfloat16)
    v_in = values.astype(jnp.bfloat16)

    kernel = functools.partial(_sdpa_kernel, b_tile=b_tile, nq=nq, nk=nk,
                               h=h, d_k=d_k, d_v=d_v, d_model=d_model)

    const = lambda i: (0, 0)
    return pl.pallas_call(
        kernel,
        out_shape=jax.ShapeDtypeStruct((b_s, nq, d_model), jnp.float32),
        grid=(b_s // b_tile,),
        in_specs=[
            pl.BlockSpec((b_tile, nq, d_model), lambda i: (i, 0, 0)),   # queries
            pl.BlockSpec((b_tile, nk, d_model), lambda i: (i, 0, 0)),   # keys
            pl.BlockSpec((b_tile, nk, d_model), lambda i: (i, 0, 0)),   # values
            pl.BlockSpec((d_model, h * d_k), const),                    # Wq (resident)
            pl.BlockSpec((d_model, h * d_k), const),                    # Wk (resident)
            pl.BlockSpec((d_model, h * d_v), const),                    # Wv (resident)
            pl.BlockSpec((1, h * d_k), const),                          # bq (resident)
            pl.BlockSpec((1, h * d_k), const),                          # bk (resident)
            pl.BlockSpec((1, h * d_v), const),                          # bv (resident)
            pl.BlockSpec((h * d_v, d_model), const),                    # Wo (resident)
            pl.BlockSpec((1, d_model), const),                          # bo (resident)
        ],
        out_specs=pl.BlockSpec((b_tile, nq, d_model), lambda i: (i, 0, 0)),
        compiler_params=pltpu.CompilerParams(
            dimension_semantics=("parallel",),
        ),
    )(q_in, k_in, v_in,
      params["wq"], params["wk"], params["wv"],
      params["bq"], params["bk"], params["bv"],
      params["wo"], params["bo"])


def reference(queries, keys, values, wq, bq, wk, bk, wv, bv, wo, bo,
              *, h, d_k, d_v):
    """Pure-JAX f32 reference with the exact PyTorch forward semantics."""
    b_s, nq, d_model = queries.shape
    nk = keys.shape[1]
    q = (queries @ wq + bq).reshape(b_s, nq, h, d_k).transpose(0, 2, 1, 3)
    k = (keys @ wk + bk).reshape(b_s, nk, h, d_k).transpose(0, 2, 3, 1)
    v = (values @ wv + bv).reshape(b_s, nk, h, d_v).transpose(0, 2, 1, 3)
    att = jax.nn.softmax(jnp.matmul(q, k) / math.sqrt(d_k), axis=-1)
    out = jnp.matmul(att, v).transpose(0, 2, 1, 3).reshape(b_s, nq, h * d_v)
    return out @ wo + bo


if __name__ == "__main__":
    # Small shapes consistent with the module: lane-dense d_model, 4 heads.
    b_s, nq, nk = 4, 16, 16
    d_model, d_k, d_v, h = 128, 32, 32, 4

    key = jax.random.PRNGKey(0)
    (kq, kk, kv, kwq, kwk, kwv, kwo, kbq, kbk, kbv, kbo) = jax.random.split(key, 11)

    queries = jax.random.normal(kq, (b_s, nq, d_model), jnp.float32)
    keys = jax.random.normal(kk, (b_s, nk, d_model), jnp.float32)
    values = jax.random.normal(kv, (b_s, nk, d_model), jnp.float32)

    def xavier(k, shape):
        fan_in, fan_out = shape
        bound = math.sqrt(6.0 / (fan_in + fan_out))
        return jax.random.uniform(k, shape, jnp.float32, -bound, bound)

    # Weights in (in_features, out_features) layout so forward is `x @ w + b`.
    wq = xavier(kwq, (d_model, h * d_k))
    wk = xavier(kwk, (d_model, h * d_k))
    wv = xavier(kwv, (d_model, h * d_v))
    wo = xavier(kwo, (h * d_v, d_model))
    # init_weights() sets biases to 0; use small random biases so the bias path
    # in the kernel is actually exercised.
    bq = jax.random.uniform(kbq, (h * d_k,), jnp.float32, -0.1, 0.1)
    bk = jax.random.uniform(kbk, (h * d_k,), jnp.float32, -0.1, 0.1)
    bv = jax.random.uniform(kbv, (h * d_v,), jnp.float32, -0.1, 0.1)
    bo = jax.random.uniform(kbo, (d_model,), jnp.float32, -0.1, 0.1)

    # One-time parameter prep (bf16 cast + scale fold), then the fused kernel.
    params = prepare_params(wq, bq, wk, bk, wv, bv, wo, bo, d_k=d_k)
    out = scaled_dot_product_attention(queries, keys, values, params,
                                       h=h, d_k=d_k, d_v=d_v)
    out = jax.block_until_ready(out)

    ref = reference(queries, keys, values, wq, bq, wk, bk, wv, bv, wo, bo,
                    h=h, d_k=d_k, d_v=d_v)

    assert out.shape == (b_s, nq, d_model)
    # bf16 inputs/weights with f32 accumulation vs f32 reference -> loosened tol.
    assert jnp.allclose(out, ref, atol=3e-2, rtol=3e-2), float(jnp.max(jnp.abs(out - ref)))
    print("KERNEL_OK")
</pallas_src>

<mosaic_0001>
module attributes {stable_mosaic.version = 11 : i64} {
  func.func @_sdpa_kernel(%arg0: i32, %arg1: memref<2x16x128xbf16, #tpu.memory_space<vmem>>, %arg2: memref<2x16x128xbf16, #tpu.memory_space<vmem>>, %arg3: memref<2x16x128xbf16, #tpu.memory_space<vmem>>, %arg4: memref<128x128xbf16, #tpu.memory_space<vmem>>, %arg5: memref<128x128xbf16, #tpu.memory_space<vmem>>, %arg6: memref<128x128xbf16, #tpu.memory_space<vmem>>, %arg7: memref<1x128xf32, #tpu.memory_space<vmem>>, %arg8: memref<1x128xf32, #tpu.memory_space<vmem>>, %arg9: memref<1x128xf32, #tpu.memory_space<vmem>>, %arg10: memref<128x128xbf16, #tpu.memory_space<vmem>>, %arg11: memref<1x128xf32, #tpu.memory_space<vmem>>, %arg12: memref<2x16x128xf32, #tpu.memory_space<vmem>>) attributes {dimension_semantics = [#tpu.dimension_semantics<parallel>], iteration_bounds = array<i64: 2>, scalar_prefetch = 0 : i64, scratch_operands = 0 : i64, tpu.core_type = #tpu.core_type<tc>, window_params = [{transform_indices = @transform_0, window_bounds = array<i64: 2, 16, 128>}, {transform_indices = @transform_1, window_bounds = array<i64: 2, 16, 128>}, {transform_indices = @transform_2, window_bounds = array<i64: 2, 16, 128>}, {pipeline_mode = #tpu.pipeline_mode<synchronous>, transform_indices = @transform_3, window_bounds = array<i64: 128, 128>}, {pipeline_mode = #tpu.pipeline_mode<synchronous>, transform_indices = @transform_4, window_bounds = array<i64: 128, 128>}, {pipeline_mode = #tpu.pipeline_mode<synchronous>, transform_indices = @transform_5, window_bounds = array<i64: 128, 128>}, {pipeline_mode = #tpu.pipeline_mode<synchronous>, transform_indices = @transform_6, window_bounds = array<i64: 1, 128>}, {pipeline_mode = #tpu.pipeline_mode<synchronous>, transform_indices = @transform_7, window_bounds = array<i64: 1, 128>}, {pipeline_mode = #tpu.pipeline_mode<synchronous>, transform_indices = @transform_8, window_bounds = array<i64: 1, 128>}, {pipeline_mode = #tpu.pipeline_mode<synchronous>, transform_indices = @transform_9, window_bounds = array<i64: 128, 128>}, {pipeline_mode = #tpu.pipeline_mode<synchronous>, transform_indices = @transform_10, window_bounds = array<i64: 1, 128>}, {transform_indices = @transform_11, window_bounds = array<i64: 2, 16, 128>}]} {
    %c0 = arith.constant 0 : index
    %c0_0 = arith.constant 0 : index
    %c0_1 = arith.constant 0 : index
    %0 = vector.load %arg1[%c0, %c0_0, %c0_1] : memref<2x16x128xbf16, #tpu.memory_space<vmem>>, vector<2x16x128xbf16>
    %1 = vector.shape_cast %0 : vector<2x16x128xbf16> to vector<32x128xbf16>
    %c0_2 = arith.constant 0 : index
    %c0_3 = arith.constant 0 : index
    %c0_4 = arith.constant 0 : index
    %2 = vector.load %arg2[%c0_2, %c0_3, %c0_4] : memref<2x16x128xbf16, #tpu.memory_space<vmem>>, vector<2x16x128xbf16>
    %3 = vector.shape_cast %2 : vector<2x16x128xbf16> to vector<32x128xbf16>
    %c0_5 = arith.constant 0 : index
    %c0_6 = arith.constant 0 : index
    %c0_7 = arith.constant 0 : index
    %4 = vector.load %arg3[%c0_5, %c0_6, %c0_7] : memref<2x16x128xbf16, #tpu.memory_space<vmem>>, vector<2x16x128xbf16>
    %5 = vector.shape_cast %4 : vector<2x16x128xbf16> to vector<32x128xbf16>
    %c0_8 = arith.constant 0 : index
    %c0_9 = arith.constant 0 : index
    %6 = vector.load %arg4[%c0_8, %c0_9] : memref<128x128xbf16, #tpu.memory_space<vmem>>, vector<128x128xbf16>
    %cst = arith.constant dense<0.000000e+00> : vector<32x128xf32>
    %7 = tpu.matmul %1, %6, %cst {dimension_numbers = #tpu.dot_dimension_numbers<[1], [0], [0], [1], [0, 0, 1, 1], [], []>} : vector<32x128xbf16>, vector<128x128xbf16>, vector<32x128xf32> -> vector<32x128xf32>
    %c0_10 = arith.constant 0 : index
    %c0_11 = arith.constant 0 : index
    %8 = vector.load %arg7[%c0_10, %c0_11] : memref<1x128xf32, #tpu.memory_space<vmem>>, vector<1x128xf32>
    %9 = vector.broadcast %8 : vector<1x128xf32> to vector<32x128xf32>
    %10 = arith.addf %7, %9 : vector<32x128xf32>
    %c0_12 = arith.constant 0 : index
    %c0_13 = arith.constant 0 : index
    %11 = vector.load %arg5[%c0_12, %c0_13] : memref<128x128xbf16, #tpu.memory_space<vmem>>, vector<128x128xbf16>
    %cst_14 = arith.constant dense<0.000000e+00> : vector<32x128xf32>
    %12 = tpu.matmul %3, %11, %cst_14 {dimension_numbers = #tpu.dot_dimension_numbers<[1], [0], [0], [1], [0, 0, 1, 1], [], []>} : vector<32x128xbf16>, vector<128x128xbf16>, vector<32x128xf32> -> vector<32x128xf32>
    %c0_15 = arith.constant 0 : index
    %c0_16 = arith.constant 0 : index
    %13 = vector.load %arg8[%c0_15, %c0_16] : memref<1x128xf32, #tpu.memory_space<vmem>>, vector<1x128xf32>
    %14 = vector.broadcast %13 : vector<1x128xf32> to vector<32x128xf32>
    %15 = arith.addf %12, %14 : vector<32x128xf32>
    %c0_17 = arith.constant 0 : index
    %c0_18 = arith.constant 0 : index
    %16 = vector.load %arg6[%c0_17, %c0_18] : memref<128x128xbf16, #tpu.memory_space<vmem>>, vector<128x128xbf16>
    %cst_19 = arith.constant dense<0.000000e+00> : vector<32x128xf32>
    %17 = tpu.matmul %5, %16, %cst_19 {dimension_numbers = #tpu.dot_dimension_numbers<[1], [0], [0], [1], [0, 0, 1, 1], [], []>} : vector<32x128xbf16>, vector<128x128xbf16>, vector<32x128xf32> -> vector<32x128xf32>
    %c0_20 = arith.constant 0 : index
    %c0_21 = arith.constant 0 : index
    %18 = vector.load %arg9[%c0_20, %c0_21] : memref<1x128xf32, #tpu.memory_space<vmem>>, vector<1x128xf32>
    %19 = vector.broadcast %18 : vector<1x128xf32> to vector<32x128xf32>
    %20 = arith.addf %17, %19 : vector<32x128xf32>
    %21 = arith.truncf %10 : vector<32x128xf32> to vector<32x128xbf16>
    %22 = arith.truncf %15 : vector<32x128xf32> to vector<32x128xbf16>
    %23 = arith.truncf %20 : vector<32x128xf32> to vector<32x128xbf16>
    %24 = vector.extract_strided_slice %21 {offsets = [0, 0], sizes = [16, 128], strides = [1, 1]} : vector<32x128xbf16> to vector<16x128xbf16>
    %25 = vector.extract_strided_slice %22 {offsets = [0, 0], sizes = [16, 128], strides = [1, 1]} : vector<32x128xbf16> to vector<16x128xbf16>
    %26 = vector.extract_strided_slice %23 {offsets = [0, 0], sizes = [16, 128], strides = [1, 1]} : vector<32x128xbf16> to vector<16x128xbf16>
    %27 = vector.extract_strided_slice %24 {offsets = [0, 0], sizes = [16, 32], strides = [1, 1]} : vector<16x128xbf16> to vector<16x32xbf16>
    %28 = vector.extract_strided_slice %25 {offsets = [0, 0], sizes = [16, 32], strides = [1, 1]} : vector<16x128xbf16> to vector<16x32xbf16>
    %29 = vector.extract_strided_slice %26 {offsets = [0, 0], sizes = [16, 32], strides = [1, 1]} : vector<16x128xbf16> to vector<16x32xbf16>
    %cst_22 = arith.constant dense<0.000000e+00> : vector<16x16xf32>
    %30 = tpu.matmul %27, %28, %cst_22 {dimension_numbers = #tpu.dot_dimension_numbers<[1], [1], [0], [0], [0, 0, 1, 0], [], []>} : vector<16x32xbf16>, vector<16x32xbf16>, vector<16x16xf32> -> vector<16x16xf32>
    %cst_23 = arith.constant dense<0xFF800000> : vector<16xf32>
    %31 = vector.multi_reduction <maximumf>, %30, %cst_23 [1] : vector<16x16xf32> to vector<16xf32>
    %32 = vector.shape_cast %31 : vector<16xf32> to vector<16x1xf32>
    %33 = vector.broadcast %32 : vector<16x1xf32> to vector<16x16xf32>
    %34 = arith.subf %30, %33 : vector<16x16xf32>
    %35 = math.exp %34 : vector<16x16xf32>
    %cst_24 = arith.constant dense<0.000000e+00> : vector<16xf32>
    %36 = vector.multi_reduction <add>, %35, %cst_24 [1] : vector<16x16xf32> to vector<16xf32>
    %37 = vector.shape_cast %36 : vector<16xf32> to vector<16x1xf32>
    %38 = arith.truncf %35 : vector<16x16xf32> to vector<16x16xbf16>
    %cst_25 = arith.constant dense<0.000000e+00> : vector<16x32xf32>
    %39 = tpu.matmul %38, %29, %cst_25 {dimension_numbers = #tpu.dot_dimension_numbers<[1], [0], [0], [1], [0, 0, 1, 1], [], []>} : vector<16x16xbf16>, vector<16x32xbf16>, vector<16x32xf32> -> vector<16x32xf32>
    %40 = tpu.reciprocal %37 : vector<16x1xf32> -> vector<16x1xf32>
    %41 = vector.broadcast %40 : vector<16x1xf32> to vector<16x32xf32>
    %42 = arith.mulf %39, %41 : vector<16x32xf32>
    %43 = arith.truncf %42 : vector<16x32xf32> to vector<16x32xbf16>
    %44 = vector.extract_strided_slice %24 {offsets = [0, 32], sizes = [16, 32], strides = [1, 1]} : vector<16x128xbf16> to vector<16x32xbf16>
    %45 = vector.extract_strided_slice %25 {offsets = [0, 32], sizes = [16, 32], strides = [1, 1]} : vector<16x128xbf16> to vector<16x32xbf16>
    %46 = vector.extract_strided_slice %26 {offsets = [0, 32], sizes = [16, 32], strides = [1, 1]} : vector<16x128xbf16> to vector<16x32xbf16>
    %cst_26 = arith.constant dense<0.000000e+00> : vector<16x16xf32>
    %47 = tpu.matmul %44, %45, %cst_26 {dimension_numbers = #tpu.dot_dimension_numbers<[1], [1], [0], [0], [0, 0, 1, 0], [], []>} : vector<16x32xbf16>, vector<16x32xbf16>, vector<16x16xf32> -> vector<16x16xf32>
    %cst_27 = arith.constant dense<0xFF800000> : vector<16xf32>
    %48 = vector.multi_reduction <maximumf>, %47, %cst_27 [1] : vector<16x16xf32> to vector<16xf32>
    %49 = vector.shape_cast %48 : vector<16xf32> to vector<16x1xf32>
    %50 = vector.broadcast %49 : vector<16x1xf32> to vector<16x16xf32>
    %51 = arith.subf %47, %50 : vector<16x16xf32>
    %52 = math.exp %51 : vector<16x16xf32>
    %cst_28 = arith.constant dense<0.000000e+00> : vector<16xf32>
    %53 = vector.multi_reduction <add>, %52, %cst_28 [1] : vector<16x16xf32> to vector<16xf32>
    %54 = vector.shape_cast %53 : vector<16xf32> to vector<16x1xf32>
    %55 = arith.truncf %52 : vector<16x16xf32> to vector<16x16xbf16>
    %cst_29 = arith.constant dense<0.000000e+00> : vector<16x32xf32>
    %56 = tpu.matmul %55, %46, %cst_29 {dimension_numbers = #tpu.dot_dimension_numbers<[1], [0], [0], [1], [0, 0, 1, 1], [], []>} : vector<16x16xbf16>, vector<16x32xbf16>, vector<16x32xf32> -> vector<16x32xf32>
    %57 = tpu.reciprocal %54 : vector<16x1xf32> -> vector<16x1xf32>
    %58 = vector.broadcast %57 : vector<16x1xf32> to vector<16x32xf32>
    %59 = arith.mulf %56, %58 : vector<16x32xf32>
    %60 = arith.truncf %59 : vector<16x32xf32> to vector<16x32xbf16>
    %61 = vector.extract_strided_slice %24 {offsets = [0, 64], sizes = [16, 32], strides = [1, 1]} : vector<16x128xbf16> to vector<16x32xbf16>
    %62 = vector.extract_strided_slice %25 {offsets = [0, 64], sizes = [16, 32], strides = [1, 1]} : vector<16x128xbf16> to vector<16x32xbf16>
    %63 = vector.extract_strided_slice %26 {offsets = [0, 64], sizes = [16, 32], strides = [1, 1]} : vector<16x128xbf16> to vector<16x32xbf16>
    %cst_30 = arith.constant dense<0.000000e+00> : vector<16x16xf32>
    %64 = tpu.matmul %61, %62, %cst_30 {dimension_numbers = #tpu.dot_dimension_numbers<[1], [1], [0], [0], [0, 0, 1, 0], [], []>} : vector<16x32xbf16>, vector<16x32xbf16>, vector<16x16xf32> -> vector<16x16xf32>
    %cst_31 = arith.constant dense<0xFF800000> : vector<16xf32>
    %65 = vector.multi_reduction <maximumf>, %64, %cst_31 [1] : vector<16x16xf32> to vector<16xf32>
    %66 = vector.shape_cast %65 : vector<16xf32> to vector<16x1xf32>
    %67 = vector.broadcast %66 : vector<16x1xf32> to vector<16x16xf32>
    %68 = arith.subf %64, %67 : vector<16x16xf32>
    %69 = math.exp %68 : vector<16x16xf32>
    %cst_32 = arith.constant dense<0.000000e+00> : vector<16xf32>
    %70 = vector.multi_reduction <add>, %69, %cst_32 [1] : vector<16x16xf32> to vector<16xf32>
    %71 = vector.shape_cast %70 : vector<16xf32> to vector<16x1xf32>
    %72 = arith.truncf %69 : vector<16x16xf32> to vector<16x16xbf16>
    %cst_33 = arith.constant dense<0.000000e+00> : vector<16x32xf32>
    %73 = tpu.matmul %72, %63, %cst_33 {dimension_numbers = #tpu.dot_dimension_numbers<[1], [0], [0], [1], [0, 0, 1, 1], [], []>} : vector<16x16xbf16>, vector<16x32xbf16>, vector<16x32xf32> -> vector<16x32xf32>
    %74 = tpu.reciprocal %71 : vector<16x1xf32> -> vector<16x1xf32>
    %75 = vector.broadcast %74 : vector<16x1xf32> to vector<16x32xf32>
    %76 = arith.mulf %73, %75 : vector<16x32xf32>
    %77 = arith.truncf %76 : vector<16x32xf32> to vector<16x32xbf16>
    %78 = vector.extract_strided_slice %24 {offsets = [0, 96], sizes = [16, 32], strides = [1, 1]} : vector<16x128xbf16> to vector<16x32xbf16>
    %79 = vector.extract_strided_slice %25 {offsets = [0, 96], sizes = [16, 32], strides = [1, 1]} : vector<16x128xbf16> to vector<16x32xbf16>
    %80 = vector.extract_strided_slice %26 {offsets = [0, 96], sizes = [16, 32], strides = [1, 1]} : vector<16x128xbf16> to vector<16x32xbf16>
    %cst_34 = arith.constant dense<0.000000e+00> : vector<16x16xf32>
    %81 = tpu.matmul %78, %79, %cst_34 {dimension_numbers = #tpu.dot_dimension_numbers<[1], [1], [0], [0], [0, 0, 1, 0], [], []>} : vector<16x32xbf16>, vector<16x32xbf16>, vector<16x16xf32> -> vector<16x16xf32>
    %cst_35 = arith.constant dense<0xFF800000> : vector<16xf32>
    %82 = vector.multi_reduction <maximumf>, %81, %cst_35 [1] : vector<16x16xf32> to vector<16xf32>
    %83 = vector.shape_cast %82 : vector<16xf32> to vector<16x1xf32>
    %84 = vector.broadcast %83 : vector<16x1xf32> to vector<16x16xf32>
    %85 = arith.subf %81, %84 : vector<16x16xf32>
    %86 = math.exp %85 : vector<16x16xf32>
    %cst_36 = arith.constant dense<0.000000e+00> : vector<16xf32>
    %87 = vector.multi_reduction <add>, %86, %cst_36 [1] : vector<16x16xf32> to vector<16xf32>
    %88 = vector.shape_cast %87 : vector<16xf32> to vector<16x1xf32>
    %89 = arith.truncf %86 : vector<16x16xf32> to vector<16x16xbf16>
    %cst_37 = arith.constant dense<0.000000e+00> : vector<16x32xf32>
    %90 = tpu.matmul %89, %80, %cst_37 {dimension_numbers = #tpu.dot_dimension_numbers<[1], [0], [0], [1], [0, 0, 1, 1], [], []>} : vector<16x16xbf16>, vector<16x32xbf16>, vector<16x32xf32> -> vector<16x32xf32>
    %91 = tpu.reciprocal %88 : vector<16x1xf32> -> vector<16x1xf32>
    %92 = vector.broadcast %91 : vector<16x1xf32> to vector<16x32xf32>
    %93 = arith.mulf %90, %92 : vector<16x32xf32>
    %94 = arith.truncf %93 : vector<16x32xf32> to vector<16x32xbf16>
    %95 = tpu.concatenate %43, %60, %77, %94 in 1 : vector<16x32xbf16>, vector<16x32xbf16>, vector<16x32xbf16>, vector<16x32xbf16> -> vector<16x128xbf16>
    %96 = vector.extract_strided_slice %21 {offsets = [16, 0], sizes = [16, 128], strides = [1, 1]} : vector<32x128xbf16> to vector<16x128xbf16>
    %97 = vector.extract_strided_slice %22 {offsets = [16, 0], sizes = [16, 128], strides = [1, 1]} : vector<32x128xbf16> to vector<16x128xbf16>
    %98 = vector.extract_strided_slice %23 {offsets = [16, 0], sizes = [16, 128], strides = [1, 1]} : vector<32x128xbf16> to vector<16x128xbf16>
    %99 = vector.extract_strided_slice %96 {offsets = [0, 0], sizes = [16, 32], strides = [1, 1]} : vector<16x128xbf16> to vector<16x32xbf16>
    %100 = vector.extract_strided_slice %97 {offsets = [0, 0], sizes = [16, 32], strides = [1, 1]} : vector<16x128xbf16> to vector<16x32xbf16>
    %101 = vector.extract_strided_slice %98 {offsets = [0, 0], sizes = [16, 32], strides = [1, 1]} : vector<16x128xbf16> to vector<16x32xbf16>
    %cst_38 = arith.constant dense<0.000000e+00> : vector<16x16xf32>
    %102 = tpu.matmul %99, %100, %cst_38 {dimension_numbers = #tpu.dot_dimension_numbers<[1], [1], [0], [0], [0, 0, 1, 0], [], []>} : vector<16x32xbf16>, vector<16x32xbf16>, vector<16x16xf32> -> vector<16x16xf32>
    %cst_39 = arith.constant dense<0xFF800000> : vector<16xf32>
    %103 = vector.multi_reduction <maximumf>, %102, %cst_39 [1] : vector<16x16xf32> to vector<16xf32>
    %104 = vector.shape_cast %103 : vector<16xf32> to vector<16x1xf32>
    %105 = vector.broadcast %104 : vector<16x1xf32> to vector<16x16xf32>
    %106 = arith.subf %102, %105 : vector<16x16xf32>
    %107 = math.exp %106 : vector<16x16xf32>
    %cst_40 = arith.constant dense<0.000000e+00> : vector<16xf32>
    %108 = vector.multi_reduction <add>, %107, %cst_40 [1] : vector<16x16xf32> to vector<16xf32>
    %109 = vector.shape_cast %108 : vector<16xf32> to vector<16x1xf32>
    %110 = arith.truncf %107 : vector<16x16xf32> to vector<16x16xbf16>
    %cst_41 = arith.constant dense<0.000000e+00> : vector<16x32xf32>
    %111 = tpu.matmul %110, %101, %cst_41 {dimension_numbers = #tpu.dot_dimension_numbers<[1], [0], [0], [1], [0, 0, 1, 1], [], []>} : vector<16x16xbf16>, vector<16x32xbf16>, vector<16x32xf32> -> vector<16x32xf32>
    %112 = tpu.reciprocal %109 : vector<16x1xf32> -> vector<16x1xf32>
    %113 = vector.broadcast %112 : vector<16x1xf32> to vector<16x32xf32>
    %114 = arith.mulf %111, %113 : vector<16x32xf32>
    %115 = arith.truncf %114 : vector<16x32xf32> to vector<16x32xbf16>
    %116 = vector.extract_strided_slice %96 {offsets = [0, 32], sizes = [16, 32], strides = [1, 1]} : vector<16x128xbf16> to vector<16x32xbf16>
    %117 = vector.extract_strided_slice %97 {offsets = [0, 32], sizes = [16, 32], strides = [1, 1]} : vector<16x128xbf16> to vector<16x32xbf16>
    %118 = vector.extract_strided_slice %98 {offsets = [0, 32], sizes = [16, 32], strides = [1, 1]} : vector<16x128xbf16> to vector<16x32xbf16>
    %cst_42 = arith.constant dense<0.000000e+00> : vector<16x16xf32>
    %119 = tpu.matmul %116, %117, %cst_42 {dimension_numbers = #tpu.dot_dimension_numbers<[1], [1], [0], [0], [0, 0, 1, 0], [], []>} : vector<16x32xbf16>, vector<16x32xbf16>, vector<16x16xf32> -> vector<16x16xf32>
    %cst_43 = arith.constant dense<0xFF800000> : vector<16xf32>
    %120 = vector.multi_reduction <maximumf>, %119, %cst_43 [1] : vector<16x16xf32> to vector<16xf32>
    %121 = vector.shape_cast %120 : vector<16xf32> to vector<16x1xf32>
    %122 = vector.broadcast %121 : vector<16x1xf32> to vector<16x16xf32>
    %123 = arith.subf %119, %122 : vector<16x16xf32>
    %124 = math.exp %123 : vector<16x16xf32>
    %cst_44 = arith.constant dense<0.000000e+00> : vector<16xf32>
    %125 = vector.multi_reduction <add>, %124, %cst_44 [1] : vector<16x16xf32> to vector<16xf32>
    %126 = vector.shape_cast %125 : vector<16xf32> to vector<16x1xf32>
    %127 = arith.truncf %124 : vector<16x16xf32> to vector<16x16xbf16>
    %cst_45 = arith.constant dense<0.000000e+00> : vector<16x32xf32>
    %128 = tpu.matmul %127, %118, %cst_45 {dimension_numbers = #tpu.dot_dimension_numbers<[1], [0], [0], [1], [0, 0, 1, 1], [], []>} : vector<16x16xbf16>, vector<16x32xbf16>, vector<16x32xf32> -> vector<16x32xf32>
    %129 = tpu.reciprocal %126 : vector<16x1xf32> -> vector<16x1xf32>
    %130 = vector.broadcast %129 : vector<16x1xf32> to vector<16x32xf32>
    %131 = arith.mulf %128, %130 : vector<16x32xf32>
    %132 = arith.truncf %131 : vector<16x32xf32> to vector<16x32xbf16>
    %133 = vector.extract_strided_slice %96 {offsets = [0, 64], sizes = [16, 32], strides = [1, 1]} : vector<16x128xbf16> to vector<16x32xbf16>
    %134 = vector.extract_strided_slice %97 {offsets = [0, 64], sizes = [16, 32], strides = [1, 1]} : vector<16x128xbf16> to vector<16x32xbf16>
    %135 = vector.extract_strided_slice %98 {offsets = [0, 64], sizes = [16, 32], strides = [1, 1]} : vector<16x128xbf16> to vector<16x32xbf16>
    %cst_46 = arith.constant dense<0.000000e+00> : vector<16x16xf32>
    %136 = tpu.matmul %133, %134, %cst_46 {dimension_numbers = #tpu.dot_dimension_numbers<[1], [1], [0], [0], [0, 0, 1, 0], [], []>} : vector<16x32xbf16>, vector<16x32xbf16>, vector<16x16xf32> -> vector<16x16xf32>
    %cst_47 = arith.constant dense<0xFF800000> : vector<16xf32>
    %137 = vector.multi_reduction <maximumf>, %136, %cst_47 [1] : vector<16x16xf32> to vector<16xf32>
    %138 = vector.shape_cast %137 : vector<16xf32> to vector<16x1xf32>
    %139 = vector.broadcast %138 : vector<16x1xf32> to vector<16x16xf32>
    %140 = arith.subf %136, %139 : vector<16x16xf32>
    %141 = math.exp %140 : vector<16x16xf32>
    %cst_48 = arith.constant dense<0.000000e+00> : vector<16xf32>
    %142 = vector.multi_reduction <add>, %141, %cst_48 [1] : vector<16x16xf32> to vector<16xf32>
    %143 = vector.shape_cast %142 : vector<16xf32> to vector<16x1xf32>
    %144 = arith.truncf %141 : vector<16x16xf32> to vector<16x16xbf16>
    %cst_49 = arith.constant dense<0.000000e+00> : vector<16x32xf32>
    %145 = tpu.matmul %144, %135, %cst_49 {dimension_numbers = #tpu.dot_dimension_numbers<[1], [0], [0], [1], [0, 0, 1, 1], [], []>} : vector<16x16xbf16>, vector<16x32xbf16>, vector<16x32xf32> -> vector<16x32xf32>
    %146 = tpu.reciprocal %143 : vector<16x1xf32> -> vector<16x1xf32>
    %147 = vector.broadcast %146 : vector<16x1xf32> to vector<16x32xf32>
    %148 = arith.mulf %145, %147 : vector<16x32xf32>
    %149 = arith.truncf %148 : vector<16x32xf32> to vector<16x32xbf16>
    %150 = vector.extract_strided_slice %96 {offsets = [0, 96], sizes = [16, 32], strides = [1, 1]} : vector<16x128xbf16> to vector<16x32xbf16>
    %151 = vector.extract_strided_slice %97 {offsets = [0, 96], sizes = [16, 32], strides = [1, 1]} : vector<16x128xbf16> to vector<16x32xbf16>
    %152 = vector.extract_strided_slice %98 {offsets = [0, 96], sizes = [16, 32], strides = [1, 1]} : vector<16x128xbf16> to vector<16x32xbf16>
    %cst_50 = arith.constant dense<0.000000e+00> : vector<16x16xf32>
    %153 = tpu.matmul %150, %151, %cst_50 {dimension_numbers = #tpu.dot_dimension_numbers<[1], [1], [0], [0], [0, 0, 1, 0], [], []>} : vector<16x32xbf16>, vector<16x32xbf16>, vector<16x16xf32> -> vector<16x16xf32>
    %cst_51 = arith.constant dense<0xFF800000> : vector<16xf32>
    %154 = vector.multi_reduction <maximumf>, %153, %cst_51 [1] : vector<16x16xf32> to vector<16xf32>
    %155 = vector.shape_cast %154 : vector<16xf32> to vector<16x1xf32>
    %156 = vector.broadcast %155 : vector<16x1xf32> to vector<16x16xf32>
    %157 = arith.subf %153, %156 : vector<16x16xf32>
    %158 = math.exp %157 : vector<16x16xf32>
    %cst_52 = arith.constant dense<0.000000e+00> : vector<16xf32>
    %159 = vector.multi_reduction <add>, %158, %cst_52 [1] : vector<16x16xf32> to vector<16xf32>
    %160 = vector.shape_cast %159 : vector<16xf32> to vector<16x1xf32>
    %161 = arith.truncf %158 : vector<16x16xf32> to vector<16x16xbf16>
    %cst_53 = arith.constant dense<0.000000e+00> : vector<16x32xf32>
    %162 = tpu.matmul %161, %152, %cst_53 {dimension_numbers = #tpu.dot_dimension_numbers<[1], [0], [0], [1], [0, 0, 1, 1], [], []>} : vector<16x16xbf16>, vector<16x32xbf16>, vector<16x32xf32> -> vector<16x32xf32>
    %163 = tpu.reciprocal %160 : vector<16x1xf32> -> vector<16x1xf32>
    %164 = vector.broadcast %163 : vector<16x1xf32> to vector<16x32xf32>
    %165 = arith.mulf %162, %164 : vector<16x32xf32>
    %166 = arith.truncf %165 : vector<16x32xf32> to vector<16x32xbf16>
    %167 = tpu.concatenate %115, %132, %149, %166 in 1 : vector<16x32xbf16>, vector<16x32xbf16>, vector<16x32xbf16>, vector<16x32xbf16> -> vector<16x128xbf16>
    %168 = tpu.concatenate %95, %167 in 0 : vector<16x128xbf16>, vector<16x128xbf16> -> vector<32x128xbf16>
    %c0_54 = arith.constant 0 : index
    %c0_55 = arith.constant 0 : index
    %169 = vector.load %arg10[%c0_54, %c0_55] : memref<128x128xbf16, #tpu.memory_space<vmem>>, vector<128x128xbf16>
    %cst_56 = arith.constant dense<0.000000e+00> : vector<32x128xf32>
    %170 = tpu.matmul %168, %169, %cst_56 {dimension_numbers = #tpu.dot_dimension_numbers<[1], [0], [0], [1], [0, 0, 1, 1], [], []>} : vector<32x128xbf16>, vector<128x128xbf16>, vector<32x128xf32> -> vector<32x128xf32>
    %c0_57 = arith.constant 0 : index
    %c0_58 = arith.constant 0 : index
    %171 = vector.load %arg11[%c0_57, %c0_58] : memref<1x128xf32, #tpu.memory_space<vmem>>, vector<1x128xf32>
    %172 = vector.broadcast %171 : vector<1x128xf32> to vector<32x128xf32>
    %173 = arith.addf %170, %172 : vector<32x128xf32>
    %174 = vector.shape_cast %173 : vector<32x128xf32> to vector<2x16x128xf32>
    %c0_59 = arith.constant 0 : index
    %c0_60 = arith.constant 0 : index
    %c0_61 = arith.constant 0 : index
    %175 = vector.load %arg12[%c0_59, %c0_60, %c0_61] : memref<2x16x128xf32, #tpu.memory_space<vmem>>, vector<2x16x128xf32>
    tpu.vector_store %arg12[%c0_59, %c0_60, %c0_61], %174 {strides = array<i32>} : memref<2x16x128xf32, #tpu.memory_space<vmem>>, vector<2x16x128xf32>,
    return
  }
  func.func @transform_0(%arg0: i32) -> (i32, i32, i32) {
    %c0_i32 = arith.constant 0 : i32
    %c0_i32_0 = arith.constant 0 : i32
    %c0_i32_1 = arith.constant 0 : i32
    return %arg0, %c0_i32, %c0_i32_0 : i32, i32, i32
  }
  func.func @transform_1(%arg0: i32) -> (i32, i32, i32) {
    %c0_i32 = arith.constant 0 : i32
    %c0_i32_0 = arith.constant 0 : i32
    %c0_i32_1 = arith.constant 0 : i32
    return %arg0, %c0_i32, %c0_i32_0 : i32, i32, i32
  }
  func.func @transform_2(%arg0: i32) -> (i32, i32, i32) {
    %c0_i32 = arith.constant 0 : i32
    %c0_i32_0 = arith.constant 0 : i32
    %c0_i32_1 = arith.constant 0 : i32
    return %arg0, %c0_i32, %c0_i32_0 : i32, i32, i32
  }
  func.func @transform_3(%arg0: i32) -> (i32, i32) {
    %c0_i32 = arith.constant 0 : i32
    %c0_i32_0 = arith.constant 0 : i32
    %c0_i32_1 = arith.constant 0 : i32
    return %c0_i32, %c0_i32_0 : i32, i32
  }
  func.func @transform_4(%arg0: i32) -> (i32, i32) {
    %c0_i32 = arith.constant 0 : i32
    %c0_i32_0 = arith.constant 0 : i32
    %c0_i32_1 = arith.constant 0 : i32
    return %c0_i32, %c0_i32_0 : i32, i32
  }
  func.func @transform_5(%arg0: i32) -> (i32, i32) {
    %c0_i32 = arith.constant 0 : i32
    %c0_i32_0 = arith.constant 0 : i32
    %c0_i32_1 = arith.constant 0 : i32
    return %c0_i32, %c0_i32_0 : i32, i32
  }
  func.func @transform_6(%arg0: i32) -> (i32, i32) {
    %c0_i32 = arith.constant 0 : i32
    %c0_i32_0 = arith.constant 0 : i32
    %c0_i32_1 = arith.constant 0 : i32
    return %c0_i32, %c0_i32_0 : i32, i32
  }
  func.func @transform_7(%arg0: i32) -> (i32, i32) {
    %c0_i32 = arith.constant 0 : i32
    %c0_i32_0 = arith.constant 0 : i32
    %c0_i32_1 = arith.constant 0 : i32
    return %c0_i32, %c0_i32_0 : i32, i32
  }
  func.func @transform_8(%arg0: i32) -> (i32, i32) {
    %c0_i32 = arith.constant 0 : i32
    %c0_i32_0 = arith.constant 0 : i32
    %c0_i32_1 = arith.constant 0 : i32
    return %c0_i32, %c0_i32_0 : i32, i32
  }
  func.func @transform_9(%arg0: i32) -> (i32, i32) {
    %c0_i32 = arith.constant 0 : i32
    %c0_i32_0 = arith.constant 0 : i32
    %c0_i32_1 = arith.constant 0 : i32
    return %c0_i32, %c0_i32_0 : i32, i32
  }
  func.func @transform_10(%arg0: i32) -> (i32, i32) {
    %c0_i32 = arith.constant 0 : i32
    %c0_i32_0 = arith.constant 0 : i32
    %c0_i32_1 = arith.constant 0 : i32
    return %c0_i32, %c0_i32_0 : i32, i32
  }
  func.func @transform_11(%arg0: i32) -> (i32, i32, i32) {
    %c0_i32 = arith.constant 0 : i32
    %c0_i32_0 = arith.constant 0 : i32
    %c0_i32_1 = arith.constant 0 : i32
    return %arg0, %c0_i32, %c0_i32_0 : i32, i32, i32
  }
}

</mosaic_0001>

<llo_original>
// kernel: tpu_custom_call.1
$region0: #{tpu_custom_call.1}
  #allocation0 [shape = 'u32[]', space=smem, size = 0x4, offset = 0x4, fixed_abs, tag = 'smem constant byte address 0x4 - core index']
  #allocation1 [shape = 'u32[144,128]{1,0:T(1,128)}', space=vmem, size = 0x12000, scoped, tag = 'internal scratch']
  %s0 = inlined_call_operand.hbm [shape: bf16[4,16,128], index: 0, kind: input, shape index: {}]
  %s1 = inlined_call_operand.hbm [shape: bf16[4,16,128], index: 1, kind: input, shape index: {}]
  %s2 = inlined_call_operand.hbm [shape: bf16[4,16,128], index: 2, kind: input, shape index: {}]
  %s3 = inlined_call_operand.hbm [shape: bf16[128,128], index: 3, kind: input, shape index: {}]
  %s4 = inlined_call_operand.hbm [shape: bf16[128,128], index: 4, kind: input, shape index: {}]
  %s5 = inlined_call_operand.hbm [shape: bf16[128,128], index: 5, kind: input, shape index: {}]
  %s6 = inlined_call_operand.vmem [shape: f32[1,128], index: 6, kind: input, shape index: {}]
  %s7 = inlined_call_operand.vmem [shape: f32[1,128], index: 7, kind: input, shape index: {}]
  %s8 = inlined_call_operand.vmem [shape: f32[1,128], index: 8, kind: input, shape index: {}]
  %s9 = inlined_call_operand.hbm [shape: bf16[128,128], index: 9, kind: input, shape index: {}]
  %s10 = inlined_call_operand.vmem [shape: f32[1,128], index: 10, kind: input, shape index: {}]
  %s11 = inlined_call_operand.hbm [shape: f32[4,16,128], index: 11, kind: output, shape index: {}]
  %s12 = sld [smem:[#allocation0]]
  $region105: #{tpu_custom_call.1} parent=0
    _
  %s14 = ssub.s32 1, %s12
  %s15 = scalar_select 0, %s14, %s12
  $region1: #{tpu_custom_call.1} parent=0
    #allocation2 [shape = 'u8[16384]{0}', space=vmem, size = 0x4000, scoped, tag = 'input window, operand 0']
    #allocation3 [shape = 's32[2]{0}', space=sflag, size = 0x8, scoped, tag = 'scoped memory for tpu_custom_call.1']
    #allocation4 [shape = 's32[2]{0}', space=sflag, size = 0x8, scoped, tag = 'scoped memory for tpu_custom_call.1']
    #allocation5 [shape = 'u8[16384]{0}', space=vmem, size = 0x4000, scoped, tag = 'input window, operand 1']
    #allocation6 [shape = 's32[2]{0}', space=sflag, size = 0x8, scoped, tag = 'scoped memory for tpu_custom_call.1']
    #allocation7 [shape = 'u8[16384]{0}', space=vmem, size = 0x4000, scoped, tag = 'input window, operand 2']
    #allocation8 [shape = 'u8[32768]{0}', space=vmem, size = 0x8000, scoped, tag = 'input window, operand 3, single buffered']
    #allocation9 [shape = 's32[1]{0}', space=sflag, size = 0x4, scoped, tag = 'scoped memory for tpu_custom_call.1']
    #allocation10 [shape = 'u8[32768]{0}', space=vmem, size = 0x8000, scoped, tag = 'input window, operand 4, single buffered']
    #allocation11 [shape = 'u8[32768]{0}', space=vmem, size = 0x8000, scoped, tag = 'input window, operand 5, single buffered']
    #allocation12 [shape = 's32[1]{0}', space=sflag, size = 0x4, scoped, tag = 'scoped memory for tpu_custom_call.1']
    #allocation13 [shape = 'u8[32768]{0}', space=vmem, size = 0x8000, scoped, tag = 'input window, operand 9, single buffered']
    #allocation14 [shape = 'u8[32768]{0}', space=vmem, size = 0x8000, scoped, tag = 'output window, operand 0']
    %16 = vsyncpa [#allocation3], 0
    %s17 = scalar_lea.sflag [#allocation3], 1
    %18 = vsyncpa %s17, 0
    %19 = vsyncpa [#allocation6], 0
    %s20 = scalar_lea.sflag [#allocation6], 1
    %21 = vsyncpa %s20, 0
    %22 = vsyncpa [#allocation9], 0
    %23 = vsyncpa [#allocation12], 0
    %24 = vsyncpa [#allocation4], 0
    %s25 = scalar_lea.sflag [#allocation4], 1
    %26 = vsyncpa %s25, 0
    loop: start=0, step=1, limit=4
    $region2: #{tpu_custom_call.1} parent=1 // loop_pre_header
      _
    $region3: #{tpu_custom_call.1} parent=1 // loop_header
      %s28 = sphi 0, %s32
      %p29 = scmp.ge.s32.totalorder %s28, 4
      %s38 = sphi 0, %s40
      %s41 = sphi 0, %s38
      %s42 = sphi 0, %s41
      %s58 = sphi 0, %s42
      %s64 = sphi 0, %s66
      %s67 = sphi 0, %s64
      %s68 = sphi 0, %s67
      %s84 = sphi 0, %s68
      %s90 = sphi 0, %s92
      %s93 = sphi 0, %s90
      %s94 = sphi 0, %s93
      %s110 = sphi 0, %s94
      %s114 = sphi 0, %s114
      %s116 = sphi 0, %s114
      %s117 = sphi 0, %s116
      %s131 = sphi 0, %s117
      %s135 = sphi 0, %s135
      %s137 = sphi 0, %s135
      %s138 = sphi 0, %s137
      %s152 = sphi 0, %s138
      %s156 = sphi 0, %s156
      %s158 = sphi 0, %s156
      %s159 = sphi 0, %s158
      %s173 = sphi 0, %s159
      %s177 = sphi 0, %s177
      %s179 = sphi 0, %s177
      %s180 = sphi 0, %s179
      %s194 = sphi 0, %s180
      %s198 = sphi 0, %s198
      %s200 = sphi 0, %s198
      %s201 = sphi 0, %s200
      %s215 = sphi 0, %s201
      %s219 = sphi 0, %s219
      %s221 = sphi 0, %s219
      %s222 = sphi 0, %s221
      %s236 = sphi 0, %s222
      %s240 = sphi 0, %s240
      %s242 = sphi 0, %s240
      %s243 = sphi 0, %s242
      %s257 = sphi 0, %s243
      %s261 = sphi 0, %s261
      %s263 = sphi 0, %s261
      %s264 = sphi 0, %s263
      %s278 = sphi 0, %s264
      %s284 = sphi 0, %s286
      %s287 = sphi 0, %s284
      %s288 = sphi 0, %s287
      %s304 = sphi 0, %s288
    $region4: #{tpu_custom_call.1} parent=1 // loop_header_branch
      %31 = sbr.rel (%p29) target = $region8
    $region5: #{tpu_custom_call.1} parent=1 // loop_body
      %s33 = ssub.s32 %s28, 1
      %s34 = ssub.s32 %s28, 2
      %s35 = sadd.s32 %s28, 1
      %s36 = ssub.s32 %s28, %s35
      %p37 = scmp.eq.s32.totalorder %s36, 0
      %s39 = sadd.s32 %s38, 1
      %s40 = scalar_select %p37, %s38, %s39
      %p43 = pneg %p37
      %p44 = scmp.eq.s32.totalorder %s28, 1
      %p45 = por %p43, %p44
      %p46 = scmp.ne.s32.totalorder %s38, %s41
      %p47 = scmp.eq.s32.totalorder %s28, 0
      %p48 = por %p46, %p47
      %p49 = scmp.ne.s32.totalorder %s38, %s41
      %p50 = scmp.eq.s32.totalorder %s33, 1
      %p51 = por %p49, %p50
      %p52 = scmp.ne.s32.totalorder %s41, %s42
      %p53 = scmp.eq.s32.totalorder %s33, 0
      %p54 = por %p52, %p53
      %p55 = scmp.ne.s32.totalorder %s41, %s42
      %p56 = scmp.eq.s32.totalorder %s34, 1
      %p57 = por %p55, %p56
      %p59 = scmp.ne.s32.totalorder %s42, %s58
      %p60 = scmp.eq.s32.totalorder %s34, 0
      %p61 = por %p59, %p60
      %s62 = ssub.s32 %s28, %s35
      %p63 = scmp.eq.s32.totalorder %s62, 0
      %s65 = sadd.s32 %s64, 1
      %s66 = scalar_select %p63, %s64, %s65
      %p69 = pneg %p63
      %p70 = scmp.eq.s32.totalorder %s28, 1
      %p71 = por %p69, %p70
      %p72 = scmp.ne.s32.totalorder %s64, %s67
      %p73 = scmp.eq.s32.totalorder %s28, 0
      %p74 = por %p72, %p73
      %p75 = scmp.ne.s32.totalorder %s64, %s67
      %p76 = scmp.eq.s32.totalorder %s33, 1
      %p77 = por %p75, %p76
      %p78 = scmp.ne.s32.totalorder %s67, %s68
      %p79 = scmp.eq.s32.totalorder %s33, 0
      %p80 = por %p78, %p79
      %p81 = scmp.ne.s32.totalorder %s67, %s68
      %p82 = scmp.eq.s32.totalorder %s34, 1
      %p83 = por %p81, %p82
      %p85 = scmp.ne.s32.totalorder %s68, %s84
      %p86 = scmp.eq.s32.totalorder %s34, 0
      %p87 = por %p85, %p86
      %s88 = ssub.s32 %s28, %s35
      %p89 = scmp.eq.s32.totalorder %s88, 0
      %s91 = sadd.s32 %s90, 1
      %s92 = scalar_select %p89, %s90, %s91
      %p95 = pneg %p89
      %p96 = scmp.eq.s32.totalorder %s28, 1
      %p97 = por %p95, %p96
      %p98 = scmp.ne.s32.totalorder %s90, %s93
      %p99 = scmp.eq.s32.totalorder %s28, 0
      %p100 = por %p98, %p99
      %p101 = scmp.ne.s32.totalorder %s90, %s93
      %p102 = scmp.eq.s32.totalorder %s33, 1
      %p103 = por %p101, %p102
      %p104 = scmp.ne.s32.totalorder %s93, %s94
      %p105 = scmp.eq.s32.totalorder %s33, 0
      %p106 = por %p104, %p105
      %p107 = scmp.ne.s32.totalorder %s93, %s94
      %p108 = scmp.eq.s32.totalorder %s34, 1
      %p109 = por %p107, %p108
      %p111 = scmp.ne.s32.totalorder %s94, %s110
      %p112 = scmp.eq.s32.totalorder %s34, 0
      %p113 = por %p111, %p112
      %s115 = sadd.s32 %s114, 1
      %p118 = scmp.eq.s32.totalorder %s28, 1
      %p119 = scmp.ne.s32.totalorder %s114, %s116
      %p120 = scmp.eq.s32.totalorder %s28, 0
      %p121 = por %p119, %p120
      %p122 = scmp.ne.s32.totalorder %s114, %s116
      %p123 = scmp.eq.s32.totalorder %s33, 1
      %p124 = por %p122, %p123
      %p125 = scmp.ne.s32.totalorder %s116, %s117
      %p126 = scmp.eq.s32.totalorder %s33, 0
      %p127 = por %p125, %p126
      %p128 = scmp.ne.s32.totalorder %s116, %s117
      %p129 = scmp.eq.s32.totalorder %s34, 1
      %p130 = por %p128, %p129
      %p132 = scmp.ne.s32.totalorder %s117, %s131
      %p133 = scmp.eq.s32.totalorder %s34, 0
      %p134 = por %p132, %p133
      %s136 = sadd.s32 %s135, 1
      %p139 = scmp.eq.s32.totalorder %s28, 1
      %p140 = scmp.ne.s32.totalorder %s135, %s137
      %p141 = scmp.eq.s32.totalorder %s28, 0
      %p142 = por %p140, %p141
      %p143 = scmp.ne.s32.totalorder %s135, %s137
      %p144 = scmp.eq.s32.totalorder %s33, 1
      %p145 = por %p143, %p144
      %p146 = scmp.ne.s32.totalorder %s137, %s138
      %p147 = scmp.eq.s32.totalorder %s33, 0
      %p148 = por %p146, %p147
      %p149 = scmp.ne.s32.totalorder %s137, %s138
      %p150 = scmp.eq.s32.totalorder %s34, 1
      %p151 = por %p149, %p150
      %p153 = scmp.ne.s32.totalorder %s138, %s152
      %p154 = scmp.eq.s32.totalorder %s34, 0
      %p155 = por %p153, %p154
      %s157 = sadd.s32 %s156, 1
      %p160 = scmp.eq.s32.totalorder %s28, 1
      %p161 = scmp.ne.s32.totalorder %s156, %s158
      %p162 = scmp.eq.s32.totalorder %s28, 0
      %p163 = por %p161, %p162
      %p164 = scmp.ne.s32.totalorder %s156, %s158
      %p165 = scmp.eq.s32.totalorder %s33, 1
      %p166 = por %p164, %p165
      %p167 = scmp.ne.s32.totalorder %s158, %s159
      %p168 = scmp.eq.s32.totalorder %s33, 0
      %p169 = por %p167, %p168
      %p170 = scmp.ne.s32.totalorder %s158, %s159
      %p171 = scmp.eq.s32.totalorder %s34, 1
      %p172 = por %p170, %p171
      %p174 = scmp.ne.s32.totalorder %s159, %s173
      %p175 = scmp.eq.s32.totalorder %s34, 0
      %p176 = por %p174, %p175
      %s178 = sadd.s32 %s177, 1
      %p181 = scmp.eq.s32.totalorder %s28, 1
      %p182 = scmp.ne.s32.totalorder %s177, %s179
      %p183 = scmp.eq.s32.totalorder %s28, 0
      %p184 = por %p182, %p183
      %p185 = scmp.ne.s32.totalorder %s177, %s179
      %p186 = scmp.eq.s32.totalorder %s33, 1
      %p187 = por %p185, %p186
      %p188 = scmp.ne.s32.totalorder %s179, %s180
      %p189 = scmp.eq.s32.totalorder %s33, 0
      %p190 = por %p188, %p189
      %p191 = scmp.ne.s32.totalorder %s179, %s180
      %p192 = scmp.eq.s32.totalorder %s34, 1
      %p193 = por %p191, %p192
      %p195 = scmp.ne.s32.totalorder %s180, %s194
      %p196 = scmp.eq.s32.totalorder %s34, 0
      %p197 = por %p195, %p196
      %s199 = sadd.s32 %s198, 1
      %p202 = scmp.eq.s32.totalorder %s28, 1
      %p203 = scmp.ne.s32.totalorder %s198, %s200
      %p204 = scmp.eq.s32.totalorder %s28, 0
      %p205 = por %p203, %p204
      %p206 = scmp.ne.s32.totalorder %s198, %s200
      %p207 = scmp.eq.s32.totalorder %s33, 1
      %p208 = por %p206, %p207
      %p209 = scmp.ne.s32.totalorder %s200, %s201
      %p210 = scmp.eq.s32.totalorder %s33, 0
      %p211 = por %p209, %p210
      %p212 = scmp.ne.s32.totalorder %s200, %s201
      %p213 = scmp.eq.s32.totalorder %s34, 1
      %p214 = por %p212, %p213
      %p216 = scmp.ne.s32.totalorder %s201, %s215
      %p217 = scmp.eq.s32.totalorder %s34, 0
      %p218 = por %p216, %p217
      %s220 = sadd.s32 %s219, 1
      %p223 = scmp.eq.s32.totalorder %s28, 1
      %p224 = scmp.ne.s32.totalorder %s219, %s221
      %p225 = scmp.eq.s32.totalorder %s28, 0
      %p226 = por %p224, %p225
      %p227 = scmp.ne.s32.totalorder %s219, %s221
      %p228 = scmp.eq.s32.totalorder %s33, 1
      %p229 = por %p227, %p228
      %p230 = scmp.ne.s32.totalorder %s221, %s222
      %p231 = scmp.eq.s32.totalorder %s33, 0
      %p232 = por %p230, %p231
      %p233 = scmp.ne.s32.totalorder %s221, %s222
      %p234 = scmp.eq.s32.totalorder %s34, 1
      %p235 = por %p233, %p234
      %p237 = scmp.ne.s32.totalorder %s222, %s236
      %p238 = scmp.eq.s32.totalorder %s34, 0
      %p239 = por %p237, %p238
      %s241 = sadd.s32 %s240, 1
      %p244 = scmp.eq.s32.totalorder %s28, 1
      %p245 = scmp.ne.s32.totalorder %s240, %s242
      %p246 = scmp.eq.s32.totalorder %s28, 0
      %p247 = por %p245, %p246
      %p248 = scmp.ne.s32.totalorder %s240, %s242
      %p249 = scmp.eq.s32.totalorder %s33, 1
      %p250 = por %p248, %p249
      %p251 = scmp.ne.s32.totalorder %s242, %s243
      %p252 = scmp.eq.s32.totalorder %s33, 0
      %p253 = por %p251, %p252
      %p254 = scmp.ne.s32.totalorder %s242, %s243
      %p255 = scmp.eq.s32.totalorder %s34, 1
      %p256 = por %p254, %p255
      %p258 = scmp.ne.s32.totalorder %s243, %s257
      %p259 = scmp.eq.s32.totalorder %s34, 0
      %p260 = por %p258, %p259
      %s262 = sadd.s32 %s261, 1
      %p265 = scmp.eq.s32.totalorder %s28, 1
      %p266 = scmp.ne.s32.totalorder %s261, %s263
      %p267 = scmp.eq.s32.totalorder %s28, 0
      %p268 = por %p266, %p267
      %p269 = scmp.ne.s32.totalorder %s261, %s263
      %p270 = scmp.eq.s32.totalorder %s33, 1
      %p271 = por %p269, %p270
      %p272 = scmp.ne.s32.totalorder %s263, %s264
      %p273 = scmp.eq.s32.totalorder %s33, 0
      %p274 = por %p272, %p273
      %p275 = scmp.ne.s32.totalorder %s263, %s264
      %p276 = scmp.eq.s32.totalorder %s34, 1
      %p277 = por %p275, %p276
      %p279 = scmp.ne.s32.totalorder %s264, %s278
      %p280 = scmp.eq.s32.totalorder %s34, 0
      %p281 = por %p279, %p280
      %s282 = ssub.s32 %s28, %s35
      %p283 = scmp.eq.s32.totalorder %s282, 0
      %s285 = sadd.s32 %s284, 1
      %s286 = scalar_select %p283, %s284, %s285
      %p289 = pneg %p283
      %p290 = scmp.eq.s32.totalorder %s28, 1
      %p291 = por %p289, %p290
      %p292 = scmp.ne.s32.totalorder %s284, %s287
      %p293 = scmp.eq.s32.totalorder %s28, 0
      %p294 = por %p292, %p293
      %p295 = scmp.ne.s32.totalorder %s284, %s287
      %p296 = scmp.eq.s32.totalorder %s33, 1
      %p297 = por %p295, %p296
      %p298 = scmp.ne.s32.totalorder %s287, %s288
      %p299 = scmp.eq.s32.totalorder %s33, 0
      %p300 = por %p298, %p299
      %p301 = scmp.ne.s32.totalorder %s287, %s288
      %p302 = scmp.eq.s32.totalorder %s34, 1
      %p303 = por %p301, %p302
      %p305 = scmp.ne.s32.totalorder %s288, %s304
      %p306 = scmp.eq.s32.totalorder %s34, 0
      %p307 = por %p305, %p306
      %p308 = scmp.le.s32.totalorder 1, %s28
      %p309 = scmp.lt.s32.totalorder %s28, 3
      %p310 = pnand %p308, %p309
      %p311 = pneg %p310
      // Predicated region
      $region9: #{tpu_custom_call.1} parent=5 // pred_check
        _
      $region10: #{tpu_custom_call.1} parent=5 // pred_check_branch
        %313 = sbr.rel (%p310) target = $region12
      $region11: #{tpu_custom_call.1} parent=5 // pred_region
        %s314 = ssub.s32 %s28, 1
        // Predicated region
        $region13: #{tpu_custom_call.1} parent=11 // pred_check
          %p315 = pneg %p127
        $region14: #{tpu_custom_call.1} parent=11 // pred_check_branch
          %317 = sbr.rel (%p315) target = $region16
        $region15: #{tpu_custom_call.1} parent=11 // pred_region
          %s319 = ssub.s32 1024, 1024
          %320 = vsyncadd [#allocation9], %s319
          %s321 = sshll.u32 [#allocation8], 4
          %s322 = int_to_ptr.vmem [resolvable:$true] %s321
          %327 = dma.hbm_to_vmem [thread:$0]  %s3, 1024, %s322, [#allocation9], 64, 64, 4
        $region16: #{tpu_custom_call.1} parent=11 // pred_fallthru
          _
        // Predicated region
        $region17: #{tpu_custom_call.1} parent=11 // pred_check
          %p328 = pneg %p148
        $region18: #{tpu_custom_call.1} parent=11 // pred_check_branch
          %330 = sbr.rel (%p328) target = $region20
        $region19: #{tpu_custom_call.1} parent=11 // pred_region
          %s332 = ssub.s32 1024, 1024
          %333 = vsyncadd [#allocation9], %s332
          %s334 = sshll.u32 [#allocation10], 4
          %s335 = int_to_ptr.vmem [resolvable:$true] %s334
          %340 = dma.hbm_to_vmem [thread:$0]  %s4, 1024, %s335, [#allocation9], 64, 64, 4
        $region20: #{tpu_custom_call.1} parent=11 // pred_fallthru
          _
        // Predicated region
        $region21: #{tpu_custom_call.1} parent=11 // pred_check
          %p341 = pneg %p169
        $region22: #{tpu_custom_call.1} parent=11 // pred_check_branch
          %343 = sbr.rel (%p341) target = $region24
        $region23: #{tpu_custom_call.1} parent=11 // pred_region
          %s345 = ssub.s32 1024, 1024
          %346 = vsyncadd [#allocation12], %s345
          %s347 = sshll.u32 [#allocation11], 4
          %s348 = int_to_ptr.vmem [resolvable:$true] %s347
          %353 = dma.hbm_to_vmem [thread:$0]  %s5, 1024, %s348, [#allocation12], 64, 64, 4
        $region24: #{tpu_custom_call.1} parent=11 // pred_fallthru
          _
        // Predicated region
        $region25: #{tpu_custom_call.1} parent=11 // pred_check
          %p354 = pneg %p190
        $region26: #{tpu_custom_call.1} parent=11 // pred_check_branch
          %356 = sbr.rel (%p354) target = $region28
        $region27: #{tpu_custom_call.1} parent=11 // pred_region
          _
        $region28: #{tpu_custom_call.1} parent=11 // pred_fallthru
          _
        // Predicated region
        $region29: #{tpu_custom_call.1} parent=11 // pred_check
          %p357 = pneg %p211
        $region30: #{tpu_custom_call.1} parent=11 // pred_check_branch
          %359 = sbr.rel (%p357) target = $region32
        $region31: #{tpu_custom_call.1} parent=11 // pred_region
          _
        $region32: #{tpu_custom_call.1} parent=11 // pred_fallthru
          _
        // Predicated region
        $region33: #{tpu_custom_call.1} parent=11 // pred_check
          %p360 = pneg %p232
        $region34: #{tpu_custom_call.1} parent=11 // pred_check_branch
          %362 = sbr.rel (%p360) target = $region36
        $region35: #{tpu_custom_call.1} parent=11 // pred_region
          _
        $region36: #{tpu_custom_call.1} parent=11 // pred_fallthru
          _
        // Predicated region
        $region37: #{tpu_custom_call.1} parent=11 // pred_check
          %p363 = pneg %p253
        $region38: #{tpu_custom_call.1} parent=11 // pred_check_branch
          %365 = sbr.rel (%p363) target = $region40
        $region39: #{tpu_custom_call.1} parent=11 // pred_region
          %s367 = ssub.s32 1024, 1024
          %368 = vsyncadd [#allocation12], %s367
          %s369 = sshll.u32 [#allocation13], 4
          %s370 = int_to_ptr.vmem [resolvable:$true] %s369
          %375 = dma.hbm_to_vmem [thread:$0]  %s9, 1024, %s370, [#allocation12], 64, 64, 4
        $region40: #{tpu_custom_call.1} parent=11 // pred_fallthru
          _
        // Predicated region
        $region41: #{tpu_custom_call.1} parent=11 // pred_check
          %p376 = pneg %p274
        $region42: #{tpu_custom_call.1} parent=11 // pred_check_branch
          %378 = sbr.rel (%p376) target = $region44
        $region43: #{tpu_custom_call.1} parent=11 // pred_region
          _
        $region44: #{tpu_custom_call.1} parent=11 // pred_fallthru
          _
      $region12: #{tpu_custom_call.1} parent=5 // pred_fallthru
        _
      %p379 = scmp.lt.s32.totalorder %s28, 2
      // Predicated region
      $region45: #{tpu_custom_call.1} parent=5 // pred_check
        %p380 = pneg %p379
      $region46: #{tpu_custom_call.1} parent=5 // pred_check_branch
        %382 = sbr.rel (%p380) target = $region48
      $region47: #{tpu_custom_call.1} parent=5 // pred_region
        // Predicated region
        $region49: #{tpu_custom_call.1} parent=47 // pred_check
          %p383 = pneg %p48
        $region50: #{tpu_custom_call.1} parent=47 // pred_check_branch
          %385 = sbr.rel (%p383) target = $region52
        $region51: #{tpu_custom_call.1} parent=47 // pred_region
          %s386 = sand.u32 %s38, 1
          %s387 = scalar_lea.sflag [#allocation3], %s386
          %s388 = sand.u32 %s38, 1
          %s389 = smul.addr %s388, 16
          %s390 = scalar_lea.vmem [#allocation2], %s389
          %s391 = smul.u32 2, %s28
          %s393 = ssub.s32 256, 256
          %394 = vsyncadd %s387, %s393
          %s395 = smul.addr %s391, 2
          %s396 = smul.addr %s395, 64
          %s397 = scalar_lea.hbm %s0, %s396
          %s398 = sshll.u32 %s390, 4
          %s399 = int_to_ptr.vmem [resolvable:$true] %s398
          %404 = dma.hbm_to_vmem [thread:$0]  %s397, 256, %s399, %s387, 64, 64, 4
        $region52: #{tpu_custom_call.1} parent=47 // pred_fallthru
          _
        // Predicated region
        $region53: #{tpu_custom_call.1} parent=47 // pred_check
          %p405 = pneg %p74
        $region54: #{tpu_custom_call.1} parent=47 // pred_check_branch
          %407 = sbr.rel (%p405) target = $region56
        $region55: #{tpu_custom_call.1} parent=47 // pred_region
          %s408 = sand.u32 %s28, 1
          %s409 = scalar_lea.sflag [#allocation6], %s408
          %s410 = sand.u32 %s64, 1
          %s411 = smul.addr %s410, 16
          %s412 = scalar_lea.vmem [#allocation5], %s411
          %s413 = smul.u32 2, %s28
          %s415 = ssub.s32 256, 256
          %416 = vsyncadd %s409, %s415
          %s417 = smul.addr %s413, 2
          %s418 = smul.addr %s417, 64
          %s419 = scalar_lea.hbm %s1, %s418
          %s420 = sshll.u32 %s412, 4
          %s421 = int_to_ptr.vmem [resolvable:$true] %s420
          %426 = dma.hbm_to_vmem [thread:$0]  %s419, 256, %s421, %s409, 64, 64, 4
        $region56: #{tpu_custom_call.1} parent=47 // pred_fallthru
          _
        // Predicated region
        $region57: #{tpu_custom_call.1} parent=47 // pred_check
          %p427 = pneg %p100
        $region58: #{tpu_custom_call.1} parent=47 // pred_check_branch
          %429 = sbr.rel (%p427) target = $region60
        $region59: #{tpu_custom_call.1} parent=47 // pred_region
          %s430 = sand.u32 %s28, 1
          %s431 = scalar_lea.sflag [#allocation6], %s430
          %s432 = sand.u32 %s90, 1
          %s433 = smul.addr %s432, 16
          %s434 = scalar_lea.vmem [#allocation7], %s433
          %s435 = smul.u32 2, %s28
          %s437 = ssub.s32 256, 256
          %438 = vsyncadd %s431, %s437
          %s439 = smul.addr %s435, 2
          %s440 = smul.addr %s439, 64
          %s441 = scalar_lea.hbm %s2, %s440
          %s442 = sshll.u32 %s434, 4
          %s443 = int_to_ptr.vmem [resolvable:$true] %s442
          %448 = dma.hbm_to_vmem [thread:$0]  %s441, 256, %s443, %s431, 64, 64, 4
        $region60: #{tpu_custom_call.1} parent=47 // pred_fallthru
          _
      $region48: #{tpu_custom_call.1} parent=5 // pred_fallthru
        _
      %p449 = scmp.le.s32.totalorder 1, %s28
      %p450 = scmp.lt.s32.totalorder %s28, 3
      %p451 = pnand %p449, %p450
      %p452 = pneg %p451
      // Predicated region
      $region61: #{tpu_custom_call.1} parent=5 // pred_check
        _
      $region62: #{tpu_custom_call.1} parent=5 // pred_check_branch
        %454 = sbr.rel (%p451) target = $region64
      $region63: #{tpu_custom_call.1} parent=5 // pred_region
        %s455 = ssub.s32 %s28, 1
        %s456 = sand.u32 %s41, 1
        %s457 = scalar_lea.sflag [#allocation3], %s456
        %s458 = sand.u32 %s41, 1
        %s459 = smul.addr %s458, 16
        %s460 = scalar_lea.vmem [#allocation2], %s459
        // Predicated region
        $region65: #{tpu_custom_call.1} parent=63 // pred_check
          %p461 = pneg %p54
        $region66: #{tpu_custom_call.1} parent=63 // pred_check_branch
          %463 = sbr.rel (%p461) target = $region68
        $region67: #{tpu_custom_call.1} parent=63 // pred_region
          %464 = dma.done %s457, 256
        $region68: #{tpu_custom_call.1} parent=63 // pred_fallthru
          _
        %s465 = sand.u32 %s33, 1
        %s466 = scalar_lea.sflag [#allocation6], %s465
        %s467 = sand.u32 %s67, 1
        %s468 = smul.addr %s467, 16
        %s469 = scalar_lea.vmem [#allocation5], %s468
        // Predicated region
        $region69: #{tpu_custom_call.1} parent=63 // pred_check
          %p470 = pneg %p80
        $region70: #{tpu_custom_call.1} parent=63 // pred_check_branch
          %472 = sbr.rel (%p470) target = $region72
        $region71: #{tpu_custom_call.1} parent=63 // pred_region
          %473 = dma.done %s466, 256
        $region72: #{tpu_custom_call.1} parent=63 // pred_fallthru
          _
        %s474 = sand.u32 %s33, 1
        %s475 = scalar_lea.sflag [#allocation6], %s474
        %s476 = sand.u32 %s93, 1
        %s477 = smul.addr %s476, 16
        %s478 = scalar_lea.vmem [#allocation7], %s477
        // Predicated region
        $region73: #{tpu_custom_call.1} parent=63 // pred_check
          %p479 = pneg %p106
        $region74: #{tpu_custom_call.1} parent=63 // pred_check_branch
          %481 = sbr.rel (%p479) target = $region76
        $region75: #{tpu_custom_call.1} parent=63 // pred_region
          %482 = dma.done %s475, 256
        $region76: #{tpu_custom_call.1} parent=63 // pred_fallthru
          _
        // Predicated region
        $region77: #{tpu_custom_call.1} parent=63 // pred_check
          %p483 = pneg %p127
        $region78: #{tpu_custom_call.1} parent=63 // pred_check_branch
          %485 = sbr.rel (%p483) target = $region80
        $region79: #{tpu_custom_call.1} parent=63 // pred_region
          %486 = dma.done [#allocation9], 1024
        $region80: #{tpu_custom_call.1} parent=63 // pred_fallthru
          _
        // Predicated region
        $region81: #{tpu_custom_call.1} parent=63 // pred_check
          %p487 = pneg %p148
        $region82: #{tpu_custom_call.1} parent=63 // pred_check_branch
          %489 = sbr.rel (%p487) target = $region84
        $region83: #{tpu_custom_call.1} parent=63 // pred_region
          %490 = dma.done [#allocation9], 1024
        $region84: #{tpu_custom_call.1} parent=63 // pred_fallthru
          _
        // Predicated region
        $region85: #{tpu_custom_call.1} parent=63 // pred_check
          %p491 = pneg %p169
        $region86: #{tpu_custom_call.1} parent=63 // pred_check_branch
          %493 = sbr.rel (%p491) target = $region88
        $region87: #{tpu_custom_call.1} parent=63 // pred_region
          %494 = dma.done [#allocation12], 1024
        $region88: #{tpu_custom_call.1} parent=63 // pred_fallthru
          _
        // Predicated region
        $region89: #{tpu_custom_call.1} parent=63 // pred_check
          %p495 = pneg %p253
        $region90: #{tpu_custom_call.1} parent=63 // pred_check_branch
          %497 = sbr.rel (%p495) target = $region92
        $region91: #{tpu_custom_call.1} parent=63 // pred_region
          %498 = dma.done [#allocation12], 1024
        $region92: #{tpu_custom_call.1} parent=63 // pred_fallthru
          _
        %s499 = sand.u32 %s41, 1
        %s500 = scalar_lea.sflag [#allocation3], %s499
        %s501 = sand.u32 %s41, 1
        %s502 = smul.addr %s501, 16
        %s503 = scalar_lea.vmem [#allocation2], %s502
        %p504 = pneg %p54
        %p505 = pneg %p51
        %s506 = sand.u32 %s33, 1
        %s507 = scalar_lea.sflag [#allocation6], %s506
        %s508 = sand.u32 %s67, 1
        %s509 = smul.addr %s508, 16
        %s510 = scalar_lea.vmem [#allocation5], %s509
        %p511 = pneg %p80
        %p512 = pneg %p77
        %s513 = sand.u32 %s33, 1
        %s514 = scalar_lea.sflag [#allocation6], %s513
        %s515 = sand.u32 %s93, 1
        %s516 = smul.addr %s515, 16
        %s517 = scalar_lea.vmem [#allocation7], %s516
        %p518 = pneg %p106
        %p519 = pneg %p103
        %p520 = pneg %p127
        %p521 = pneg %p124
        %p522 = pneg %p148
        %p523 = pneg %p145
        %p524 = pneg %p169
        %p525 = pneg %p166
        %p526 = pneg %p190
        %p527 = pneg %p187
        %p528 = pneg %p211
        %p529 = pneg %p208
        %p530 = pneg %p232
        %p531 = pneg %p229
        %p532 = pneg %p253
        %p533 = pneg %p250
        %p534 = pneg %p274
        %p535 = pneg %p271
        %p536 = pneg %p300
        %p537 = pneg %p297
        %s538 = sand.u32 %s287, 1
        %s539 = scalar_lea.sflag [#allocation4], %s538
        %s540 = sand.u32 %s287, 1
        %s541 = smul.addr %s540, 32
        %s542 = scalar_lea.vmem [#allocation14], %s541
        %s543 = smul.u32 2, %s33
        %s544 = smul.u32 2, %s33
        %s545 = smul.u32 2, %s33
        %s546 = smul.u32 2, %s33
        %v548 = vld [vmem:[%s460] sm:$0xf]
        %v549 = vld [vmem:[%s460 + $0x4] sm:$0xf]
        %v550 = vld [vmem:[%s460 + $0x8] sm:$0xf]
        %v551 = vld [vmem:[%s460 + $0xc] sm:$0xf]
        %v552 = vld [vmem:[%s469] sm:$0xf]
        %v553 = vld [vmem:[%s469 + $0x4] sm:$0xf]
        %v554 = vld [vmem:[%s469 + $0x8] sm:$0xf]
        %v555 = vld [vmem:[%s469 + $0xc] sm:$0xf]
        %v556 = vld [vmem:[%s478] sm:$0xf]
        %v557 = vld [vmem:[%s478 + $0x4] sm:$0xf]
        %v558 = vld [vmem:[%s478 + $0x8] sm:$0xf]
        %v559 = vld [vmem:[%s478 + $0xc] sm:$0xf]
        %v560 = vld [vmem:[#allocation8] sm:$0xf]
        %v561 = vld [vmem:[#allocation8 + $0x4] sm:$0xf]
        %v562 = vld [vmem:[#allocation8 + $0x8] sm:$0xf]
        %v563 = vld [vmem:[#allocation8 + $0xc] sm:$0xf]
        %v564 = vld [vmem:[#allocation8 + $0x10] sm:$0xf]
        %v565 = vld [vmem:[#allocation8 + $0x14] sm:$0xf]
        %v566 = vld [vmem:[#allocation8 + $0x18] sm:$0xf]
        %v567 = vld [vmem:[#allocation8 + $0x1c] sm:$0xf]
        %v568 = vld [vmem:[#allocation8 + $0x20] sm:$0xf]
        %v569 = vld [vmem:[#allocation8 + $0x24] sm:$0xf]
        %v570 = vld [vmem:[#allocation8 + $0x28] sm:$0xf]
        %v571 = vld [vmem:[#allocation8 + $0x2c] sm:$0xf]
        %v572 = vld [vmem:[#allocation8 + $0x30] sm:$0xf]
        %v573 = vld [vmem:[#allocation8 + $0x34] sm:$0xf]
        %v574 = vld [vmem:[#allocation8 + $0x38] sm:$0xf]
        %v575 = vld [vmem:[#allocation8 + $0x3c] sm:$0xf]
        %v576 = vld [vmem:[%s6] sm:$0x1]
        %v578 = vlaneseq
        %v579 = vshrl.u32 %v578, 7
        %v580 = vsub.s32 0, %v579
        %v581 = vrot.slane %v576, %v580
        %v587 = vunpack.c.l.b16 %v548
        %v588 = vunpack.c.l.b16 %v549
        %v589 = vunpack.c.l.b16 %v550
        %v590 = vunpack.c.l.b16 %v551
        %v591 = vpack.c.b16 %v588, %v587
        %v592 = vpack.c.b16 %v590, %v589
        %v611 = vunpack.c.l.b16 %v560
        %v612 = vunpack.c.l.b16 %v561
        %v613 = vunpack.c.l.b16 %v562
        %v614 = vunpack.c.l.b16 %v563
        %v615 = vunpack.c.l.b16 %v564
        %v616 = vunpack.c.l.b16 %v565
        %v617 = vunpack.c.l.b16 %v566
        %v618 = vunpack.c.l.b16 %v567
        %v619 = vunpack.c.l.b16 %v568
        %v620 = vunpack.c.l.b16 %v569
        %v621 = vunpack.c.l.b16 %v570
        %v622 = vunpack.c.l.b16 %v571
        %v623 = vunpack.c.l.b16 %v572
        %v624 = vunpack.c.l.b16 %v573
        %v625 = vunpack.c.l.b16 %v574
        %v626 = vunpack.c.l.b16 %v575
        %v627 = vpack.c.b16 %v612, %v611
        %v628 = vpack.c.b16 %v614, %v613
        %v629 = vpack.c.b16 %v616, %v615
        %v630 = vpack.c.b16 %v618, %v617
        %v631 = vpack.c.b16 %v620, %v619
        %v632 = vpack.c.b16 %v622, %v621
        %v633 = vpack.c.b16 %v624, %v623
        %v634 = vpack.c.b16 %v626, %v625
        %643 = vmatprep.subr.bf16.mxu0 0
        %644 = vmatpush1.bf16.msra.mxu0 %v634
        %645 = vmatprep.subr.bf16.mxu0 0
        %646 = vmatpush1.bf16.msra.mxu0 %v633
        %647 = vmatprep.subr.bf16.mxu0 0
        %648 = vmatpush1.bf16.msra.mxu0 %v632
        %649 = vmatprep.subr.bf16.mxu0 0
        %650 = vmatpush1.bf16.msra.mxu0 %v631
        %651 = vmatprep.subr.bf16.mxu0 0
        %652 = vmatpush1.bf16.msra.mxu0 %v630
        %653 = vmatprep.subr.bf16.mxu0 0
        %654 = vmatpush1.bf16.msra.mxu0 %v629
        %655 = vmatprep.subr.bf16.mxu0 0
        %656 = vmatpush1.bf16.msra.mxu0 %v628
        %657 = vmatprep.subr.bf16.mxu0 0
        %658 = vmatpush1.bf16.msra.mxu0 %v627
        %659 = vmatprep.subr.bf16.mxu0 0
        %660 = vmatpush2.bf16.msra.mxu0 0
        %661 = vmatprep.subr.bf16.mxu0 0
        %662 = vmatpush2.bf16.msra.mxu0 0
        %663 = vmatprep.subr.bf16.mxu0 0
        %664 = vmatpush2.bf16.msra.mxu0 0
        %665 = vmatprep.subr.bf16.mxu0 0
        %666 = vmatpush2.bf16.msra.mxu0 0
        %667 = vmatprep.subr.bf16.mxu0 0
        %668 = vmatpush2.bf16.msra.mxu0 0
        %669 = vmatprep.subr.bf16.mxu0 0
        %670 = vmatpush2.bf16.msra.mxu0 0
        %671 = vmatprep.subr.bf16.mxu0 0
        %672 = vmatpush2.bf16.msra.mxu0 0
        %673 = vmatprep.subr.bf16.mxu0 0
        %674 = vmatpush2.bf16.msra.mxu0 0
        %675 = vmatprep.mubr.bf16.mxu0 0
        %676 = vmatmul.mubr.bf16.gmra.mxu0 %v591
        %v677 = vpop.f32.mrf.mxu0
        %v678 = vadd.f32 %v581, %v677
        %v679 = vpop.f32.mrf.mxu0
        %v680 = vpop.f32.mrf.mxu0
        %v681 = vadd.f32 %v581, %v680
        %v682 = vpop.f32.mrf.mxu0
        %683 = vmatprep.mubr.bf16.mxu0 0
        %684 = vmatmul.mubr.bf16.gmra.mxu0 %v592
        %v685 = vpop.f32.mrf.mxu0
        %v686 = vadd.f32 %v581, %v685
        %v687 = vpop.f32.mrf.mxu0
        %v688 = vpop.f32.mrf.mxu0
        %v689 = vadd.f32 %v581, %v688
        %v690 = vpop.f32.mrf.mxu0
        %691 = vdwg.mxu0
        %v692 = vld [vmem:[#allocation10] sm:$0xf]
        %v693 = vld [vmem:[#allocation10 + $0x4] sm:$0xf]
        %v694 = vld [vmem:[#allocation10 + $0x8] sm:$0xf]
        %v695 = vld [vmem:[#allocation10 + $0xc] sm:$0xf]
        %v696 = vld [vmem:[#allocation10 + $0x10] sm:$0xf]
        %v697 = vld [vmem:[#allocation10 + $0x14] sm:$0xf]
        %v698 = vld [vmem:[#allocation10 + $0x18] sm:$0xf]
        %v699 = vld [vmem:[#allocation10 + $0x1c] sm:$0xf]
        %v700 = vld [vmem:[#allocation10 + $0x20] sm:$0xf]
        %v701 = vld [vmem:[#allocation10 + $0x24] sm:$0xf]
        %v702 = vld [vmem:[#allocation10 + $0x28] sm:$0xf]
        %v703 = vld [vmem:[#allocation10 + $0x2c] sm:$0xf]
        %v704 = vld [vmem:[#allocation10 + $0x30] sm:$0xf]
        %v705 = vld [vmem:[#allocation10 + $0x34] sm:$0xf]
        %v706 = vld [vmem:[#allocation10 + $0x38] sm:$0xf]
        %v707 = vld [vmem:[#allocation10 + $0x3c] sm:$0xf]
        %v708 = vld [vmem:[%s7] sm:$0x1]
        %v710 = vlaneseq
        %v711 = vshrl.u32 %v710, 7
        %v712 = vsub.s32 0, %v711
        %v713 = vrot.slane %v708, %v712
        %v719 = vunpack.c.l.b16 %v552
        %v720 = vunpack.c.l.b16 %v553
        %v721 = vunpack.c.l.b16 %v554
        %v722 = vunpack.c.l.b16 %v555
        %v723 = vpack.c.b16 %v720, %v719
        %v724 = vpack.c.b16 %v722, %v721
        %v743 = vunpack.c.l.b16 %v692
        %v744 = vunpack.c.l.b16 %v693
        %v745 = vunpack.c.l.b16 %v694
        %v746 = vunpack.c.l.b16 %v695
        %v747 = vunpack.c.l.b16 %v696
        %v748 = vunpack.c.l.b16 %v697
        %v749 = vunpack.c.l.b16 %v698
        %v750 = vunpack.c.l.b16 %v699
        %v751 = vunpack.c.l.b16 %v700
        %v752 = vunpack.c.l.b16 %v701
        %v753 = vunpack.c.l.b16 %v702
        %v754 = vunpack.c.l.b16 %v703
        %v755 = vunpack.c.l.b16 %v704
        %v756 = vunpack.c.l.b16 %v705
        %v757 = vunpack.c.l.b16 %v706
        %v758 = vunpack.c.l.b16 %v707
        %v759 = vpack.c.b16 %v744, %v743
        %v760 = vpack.c.b16 %v746, %v745
        %v761 = vpack.c.b16 %v748, %v747
        %v762 = vpack.c.b16 %v750, %v749
        %v763 = vpack.c.b16 %v752, %v751
        %v764 = vpack.c.b16 %v754, %v753
        %v765 = vpack.c.b16 %v756, %v755
        %v766 = vpack.c.b16 %v758, %v757
        %775 = vmatprep.subr.bf16.mxu0 0
        %776 = vmatpush1.bf16.msra.mxu0 %v766
        %777 = vmatprep.subr.bf16.mxu0 0
        %778 = vmatpush1.bf16.msra.mxu0 %v765
        %779 = vmatprep.subr.bf16.mxu0 0
        %780 = vmatpush1.bf16.msra.mxu0 %v764
        %781 = vmatprep.subr.bf16.mxu0 0
        %782 = vmatpush1.bf16.msra.mxu0 %v763
        %783 = vmatprep.subr.bf16.mxu0 0
        %784 = vmatpush1.bf16.msra.mxu0 %v762
        %785 = vmatprep.subr.bf16.mxu0 0
        %786 = vmatpush1.bf16.msra.mxu0 %v761
        %787 = vmatprep.subr.bf16.mxu0 0
        %788 = vmatpush1.bf16.msra.mxu0 %v760
        %789 = vmatprep.subr.bf16.mxu0 0
        %790 = vmatpush1.bf16.msra.mxu0 %v759
        %791 = vmatprep.subr.bf16.mxu0 0
        %792 = vmatpush2.bf16.msra.mxu0 0
        %793 = vmatprep.subr.bf16.mxu0 0
        %794 = vmatpush2.bf16.msra.mxu0 0
        %795 = vmatprep.subr.bf16.mxu0 0
        %796 = vmatpush2.bf16.msra.mxu0 0
        %797 = vmatprep.subr.bf16.mxu0 0
        %798 = vmatpush2.bf16.msra.mxu0 0
        %799 = vmatprep.subr.bf16.mxu0 0
        %800 = vmatpush2.bf16.msra.mxu0 0
        %801 = vmatprep.subr.bf16.mxu0 0
        %802 = vmatpush2.bf16.msra.mxu0 0
        %803 = vmatprep.subr.bf16.mxu0 0
        %804 = vmatpush2.bf16.msra.mxu0 0
        %805 = vmatprep.subr.bf16.mxu0 0
        %806 = vmatpush2.bf16.msra.mxu0 0
        %807 = vmatprep.mubr.bf16.mxu0 0
        %808 = vmatmul.mubr.bf16.gmra.mxu0 %v723
        %v809 = vpop.f32.mrf.mxu0
        %v810 = vadd.f32 %v713, %v809
        %v811 = vpop.f32.mrf.mxu0
        %v812 = vpop.f32.mrf.mxu0
        %v813 = vadd.f32 %v713, %v812
        %v814 = vpop.f32.mrf.mxu0
        %815 = vmatprep.mubr.bf16.mxu0 0
        %816 = vmatmul.mubr.bf16.gmra.mxu0 %v724
        %v817 = vpop.f32.mrf.mxu0
        %v818 = vadd.f32 %v713, %v817
        %v819 = vpop.f32.mrf.mxu0
        %v820 = vpop.f32.mrf.mxu0
        %v821 = vadd.f32 %v713, %v820
        %v822 = vpop.f32.mrf.mxu0
        %823 = vdwg.mxu0
        %v824 = vld [vmem:[#allocation11] sm:$0xf]
        %v825 = vld [vmem:[#allocation11 + $0x4] sm:$0xf]
        %v826 = vld [vmem:[#allocation11 + $0x8] sm:$0xf]
        %v827 = vld [vmem:[#allocation11 + $0xc] sm:$0xf]
        %v828 = vld [vmem:[#allocation11 + $0x10] sm:$0xf]
        %v829 = vld [vmem:[#allocation11 + $0x14] sm:$0xf]
        %v830 = vld [vmem:[#allocation11 + $0x18] sm:$0xf]
        %v831 = vld [vmem:[#allocation11 + $0x1c] sm:$0xf]
        %v832 = vld [vmem:[#allocation11 + $0x20] sm:$0xf]
        %v833 = vld [vmem:[#allocation11 + $0x24] sm:$0xf]
        %v834 = vld [vmem:[#allocation11 + $0x28] sm:$0xf]
        %v835 = vld [vmem:[#allocation11 + $0x2c] sm:$0xf]
        %v836 = vld [vmem:[#allocation11 + $0x30] sm:$0xf]
        %v837 = vld [vmem:[#allocation11 + $0x34] sm:$0xf]
        %v838 = vld [vmem:[#allocation11 + $0x38] sm:$0xf]
        %v839 = vld [vmem:[#allocation11 + $0x3c] sm:$0xf]
        %v840 = vld [vmem:[%s8] sm:$0x1]
        %v842 = vlaneseq
        %v843 = vshrl.u32 %v842, 7
        %v844 = vsub.s32 0, %v843
        %v845 = vrot.slane %v840, %v844
        %v851 = vunpack.c.l.b16 %v556
        %v852 = vunpack.c.l.b16 %v557
        %v853 = vunpack.c.l.b16 %v558
        %v854 = vunpack.c.l.b16 %v559
        %v855 = vpack.c.b16 %v852, %v851
        %v856 = vpack.c.b16 %v854, %v853
        %v875 = vunpack.c.l.b16 %v824
        %v876 = vunpack.c.l.b16 %v825
        %v877 = vunpack.c.l.b16 %v826
        %v878 = vunpack.c.l.b16 %v827
        %v879 = vunpack.c.l.b16 %v828
        %v880 = vunpack.c.l.b16 %v829
        %v881 = vunpack.c.l.b16 %v830
        %v882 = vunpack.c.l.b16 %v831
        %v883 = vunpack.c.l.b16 %v832
        %v884 = vunpack.c.l.b16 %v833
        %v885 = vunpack.c.l.b16 %v834
        %v886 = vunpack.c.l.b16 %v835
        %v887 = vunpack.c.l.b16 %v836
        %v888 = vunpack.c.l.b16 %v837
        %v889 = vunpack.c.l.b16 %v838
        %v890 = vunpack.c.l.b16 %v839
        %v891 = vpack.c.b16 %v876, %v875
        %v892 = vpack.c.b16 %v878, %v877
        %v893 = vpack.c.b16 %v880, %v879
        %v894 = vpack.c.b16 %v882, %v881
        %v895 = vpack.c.b16 %v884, %v883
        %v896 = vpack.c.b16 %v886, %v885
        %v897 = vpack.c.b16 %v888, %v887
        %v898 = vpack.c.b16 %v890, %v889
        %907 = vmatprep.subr.bf16.mxu0 0
        %908 = vmatpush1.bf16.msra.mxu0 %v898
        %909 = vmatprep.subr.bf16.mxu0 0
        %910 = vmatpush1.bf16.msra.mxu0 %v897
        %911 = vmatprep.subr.bf16.mxu0 0
        %912 = vmatpush1.bf16.msra.mxu0 %v896
        %913 = vmatprep.subr.bf16.mxu0 0
        %914 = vmatpush1.bf16.msra.mxu0 %v895
        %915 = vmatprep.subr.bf16.mxu0 0
        %916 = vmatpush1.bf16.msra.mxu0 %v894
        %917 = vmatprep.subr.bf16.mxu0 0
        %918 = vmatpush1.bf16.msra.mxu0 %v893
        %919 = vmatprep.subr.bf16.mxu0 0
        %920 = vmatpush1.bf16.msra.mxu0 %v892
        %921 = vmatprep.subr.bf16.mxu0 0
        %922 = vmatpush1.bf16.msra.mxu0 %v891
        %923 = vmatprep.subr.bf16.mxu0 0
        %924 = vmatpush2.bf16.msra.mxu0 0
        %925 = vmatprep.subr.bf16.mxu0 0
        %926 = vmatpush2.bf16.msra.mxu0 0
        %927 = vmatprep.subr.bf16.mxu0 0
        %928 = vmatpush2.bf16.msra.mxu0 0
        %929 = vmatprep.subr.bf16.mxu0 0
        %930 = vmatpush2.bf16.msra.mxu0 0
        %931 = vmatprep.subr.bf16.mxu0 0
        %932 = vmatpush2.bf16.msra.mxu0 0
        %933 = vmatprep.subr.bf16.mxu0 0
        %934 = vmatpush2.bf16.msra.mxu0 0
        %935 = vmatprep.subr.bf16.mxu0 0
        %936 = vmatpush2.bf16.msra.mxu0 0
        %937 = vmatprep.subr.bf16.mxu0 0
        %938 = vmatpush2.bf16.msra.mxu0 0
        %939 = vmatprep.mubr.bf16.mxu0 0
        %940 = vmatmul.mubr.bf16.gmra.mxu0 %v855
        %v941 = vpop.f32.mrf.mxu0
        %v942 = vadd.f32 %v845, %v941
        %v943 = vpop.f32.mrf.mxu0
        %v944 = vpop.f32.mrf.mxu0
        %v945 = vadd.f32 %v845, %v944
        %v946 = vpop.f32.mrf.mxu0
        %947 = vmatprep.mubr.bf16.mxu0 0
        %948 = vmatmul.mubr.bf16.gmra.mxu0 %v856
        %v949 = vpop.f32.mrf.mxu0
        %v950 = vadd.f32 %v845, %v949
        %v951 = vpop.f32.mrf.mxu0
        %v952 = vpop.f32.mrf.mxu0
        %v953 = vadd.f32 %v845, %v952
        %v954 = vpop.f32.mrf.mxu0
        %955 = vdwg.mxu0
        %v956 = vpack.c.bf16 %v681, %v678
        %v957 = vpack.c.bf16 %v689, %v686
        %v958 = vpack.c.bf16 %v813, %v810
        %v959 = vpack.c.bf16 %v821, %v818
        %v960 = vpack.c.bf16 %v945, %v942
        %v961 = vpack.c.bf16 %v953, %v950
        %vm962 = vcmask 261120
        %v964 = vsel %vm962, %v956, 0
        %v967 = vsel %vm962, %v958, 0
        %969 = vmatprep.subr.bf16.mxu0 0
        %970 = vmatpush1.bf16.xpose.msra.mxu0 0
        %971 = vmatprep.subr.bf16.mxu0 0
        %972 = vmatpush1.bf16.xpose.msra.mxu0 0
        %973 = vmatprep.subr.bf16.mxu0 0
        %974 = vmatpush1.bf16.xpose.msra.mxu0 0
        %975 = vmatprep.subr.bf16.mxu0 0
        %976 = vmatpush1.bf16.xpose.msra.mxu0 0
        %977 = vmatprep.subr.bf16.mxu0 0
        %978 = vmatpush1.bf16.xpose.msra.mxu0 0
        %979 = vmatprep.subr.bf16.mxu0 0
        %980 = vmatpush1.bf16.xpose.msra.mxu0 0
        %981 = vmatprep.subr.bf16.mxu0 0
        %982 = vmatpush1.bf16.xpose.msra.mxu0 0
        %983 = vmatprep.subr.bf16.mxu0 0
        %984 = vmatpush1.bf16.xpose.msra.mxu0 %v967
        %985 = vmatprep.subr.bf16.mxu0 0
        %986 = vmatpush2.bf16.xpose.msra.mxu0 0
        %987 = vmatprep.subr.bf16.mxu0 0
        %988 = vmatpush2.bf16.xpose.msra.mxu0 0
        %989 = vmatprep.subr.bf16.mxu0 0
        %990 = vmatpush2.bf16.xpose.msra.mxu0 0
        %991 = vmatprep.subr.bf16.mxu0 0
        %992 = vmatpush2.bf16.xpose.msra.mxu0 0
        %993 = vmatprep.subr.bf16.mxu0 0
        %994 = vmatpush2.bf16.xpose.msra.mxu0 0
        %995 = vmatprep.subr.bf16.mxu0 0
        %996 = vmatpush2.bf16.xpose.msra.mxu0 0
        %997 = vmatprep.subr.bf16.mxu0 0
        %998 = vmatpush2.bf16.xpose.msra.mxu0 0
        %999 = vmatprep.subr.bf16.mxu0 0
        %1000 = vmatpush2.bf16.xpose.msra.mxu0 0
        %1001 = vmatprep.mubr.bf16.mxu0 0
        %1002 = vmatmul.mubr.bf16.gmra.mxu0 %v964
        %v1003 = vpop.f32.mrf.mxu0
        %v1004 = vadd.f32 0.0, %v1003
        %v1005 = vpop.f32.mrf.mxu0
        %v1006 = vpop.f32.mrf.mxu0
        %v1007 = vadd.f32 0.0, %v1006
        %v1008 = vpop.f32.mrf.mxu0
        %1009 = vdwg.mxu0
        %vm1010 = vcmask 130048
        %v1011 = vsel %vm1010, %v1004, -inf
        %1012 = vmax.xlane.f32.xlu0 %v1011
        %v1013 = vpop.xlane.xlu0 %1012
        %v1014 = vsel %vm1010, %v1007, -inf
        %1015 = vmax.xlane.f32.xlu0 %v1014
        %v1016 = vpop.xlane.xlu0 %1015
        %v1017 = vsub.f32 %v1004, %v1013
        %v1018 = vsub.f32 %v1007, %v1016
        %v1019 = vmul.f32 %v1017, 1.442695
        %v1020 = vpow.pop %v1019
        %v1021 = vmul.f32 %v1018, 1.442695
        %v1022 = vpow.pop %v1021
        %v1023 = vsel %vm1010, %v1020, 0.0
        %1024 = vadd.xlane.f32.xlu0 %v1023
        %v1025 = vpop.xlane.xlu0 %1024
        %v1026 = vsel %vm1010, %v1022, 0.0
        %1027 = vadd.xlane.f32.xlu0 %v1026
        %v1028 = vpop.xlane.xlu0 %1027
        %v1029 = vpack.c.bf16 %v1022, %v1020
        %v1031 = vsel %vm1010, %v1029, 0
        %1033 = vmatprep.subr.bf16.mxu0 0
        %1034 = vmatpush1.bf16.msra.mxu0 0
        %1035 = vmatprep.subr.bf16.mxu0 0
        %1036 = vmatpush1.bf16.msra.mxu0 0
        %1037 = vmatprep.subr.bf16.mxu0 0
        %1038 = vmatpush1.bf16.msra.mxu0 0
        %1039 = vmatprep.subr.bf16.mxu0 0
        %1040 = vmatpush1.bf16.msra.mxu0 0
        %1041 = vmatprep.subr.bf16.mxu0 0
        %1042 = vmatpush1.bf16.msra.mxu0 0
        %1043 = vmatprep.subr.bf16.mxu0 0
        %1044 = vmatpush1.bf16.msra.mxu0 0
        %1045 = vmatprep.subr.bf16.mxu0 0
        %1046 = vmatpush1.bf16.msra.mxu0 0
        %1047 = vmatprep.subr.bf16.mxu0 0
        %1048 = vmatpush1.bf16.msra.mxu0 %v960
        %1049 = vmatprep.subr.bf16.mxu0 0
        %1050 = vmatpush2.bf16.msra.mxu0 0
        %1051 = vmatprep.subr.bf16.mxu0 0
        %1052 = vmatpush2.bf16.msra.mxu0 0
        %1053 = vmatprep.subr.bf16.mxu0 0
        %1054 = vmatpush2.bf16.msra.mxu0 0
        %1055 = vmatprep.subr.bf16.mxu0 0
        %1056 = vmatpush2.bf16.msra.mxu0 0
        %1057 = vmatprep.subr.bf16.mxu0 0
        %1058 = vmatpush2.bf16.msra.mxu0 0
        %1059 = vmatprep.subr.bf16.mxu0 0
        %1060 = vmatpush2.bf16.msra.mxu0 0
        %1061 = vmatprep.subr.bf16.mxu0 0
        %1062 = vmatpush2.bf16.msra.mxu0 0
        %1063 = vmatprep.subr.bf16.mxu0 0
        %1064 = vmatpush2.bf16.msra.mxu0 0
        %1065 = vmatprep.mubr.bf16.mxu0 0
        %1066 = vmatmul.mubr.bf16.gmra.mxu0 %v1031
        %v1067 = vpop.f32.mrf.mxu0
        %v1068 = vadd.f32 0.0, %v1067
        %v1069 = vpop.f32.mrf.mxu0
        %v1070 = vpop.f32.mrf.mxu0
        %v1071 = vadd.f32 0.0, %v1070
        %v1072 = vpop.f32.mrf.mxu0
        %1073 = vdwg.mxu0
        %v1074 = vrcp.pop %v1025
        %v1075 = vrcp.pop %v1028
        %v1076 = vmul.f32 %v1068, %v1074
        %v1077 = vmul.f32 %v1071, %v1075
        %v1078 = vpack.c.bf16 %v1077, %v1076
        %1080 = vrot.lane.b32.xlu0 %v956, 96
        %v1081 = vpop.permute.xlu0 %1080
        %1083 = vrot.lane.b32.xlu0 %v958, 96
        %v1084 = vpop.permute.xlu0 %1083
        %v1086 = vsel %vm962, %v1081, 0
        %v1089 = vsel %vm962, %v1084, 0
        %1091 = vmatprep.subr.bf16.mxu0 0
        %1092 = vmatpush1.bf16.xpose.msra.mxu0 0
        %1093 = vmatprep.subr.bf16.mxu0 0
        %1094 = vmatpush1.bf16.xpose.msra.mxu0 0
        %1095 = vmatprep.subr.bf16.mxu0 0
        %1096 = vmatpush1.bf16.xpose.msra.mxu0 0
        %1097 = vmatprep.subr.bf16.mxu0 0
        %1098 = vmatpush1.bf16.xpose.msra.mxu0 0
        %1099 = vmatprep.subr.bf16.mxu0 0
        %1100 = vmatpush1.bf16.xpose.msra.mxu0 0
        %1101 = vmatprep.subr.bf16.mxu0 0
        %1102 = vmatpush1.bf16.xpose.msra.mxu0 0
        %1103 = vmatprep.subr.bf16.mxu0 0
        %1104 = vmatpush1.bf16.xpose.msra.mxu0 0
        %1105 = vmatprep.subr.bf16.mxu0 0
        %1106 = vmatpush1.bf16.xpose.msra.mxu0 %v1089
        %1107 = vmatprep.subr.bf16.mxu0 0
        %1108 = vmatpush2.bf16.xpose.msra.mxu0 0
        %1109 = vmatprep.subr.bf16.mxu0 0
        %1110 = vmatpush2.bf16.xpose.msra.mxu0 0
        %1111 = vmatprep.subr.bf16.mxu0 0
        %1112 = vmatpush2.bf16.xpose.msra.mxu0 0
        %1113 = vmatprep.subr.bf16.mxu0 0
        %1114 = vmatpush2.bf16.xpose.msra.mxu0 0
        %1115 = vmatprep.subr.bf16.mxu0 0
        %1116 = vmatpush2.bf16.xpose.msra.mxu0 0
        %1117 = vmatprep.subr.bf16.mxu0 0
        %1118 = vmatpush2.bf16.xpose.msra.mxu0 0
        %1119 = vmatprep.subr.bf16.mxu0 0
        %1120 = vmatpush2.bf16.xpose.msra.mxu0 0
        %1121 = vmatprep.subr.bf16.mxu0 0
        %1122 = vmatpush2.bf16.xpose.msra.mxu0 0
        %1123 = vmatprep.mubr.bf16.mxu0 0
        %1124 = vmatmul.mubr.bf16.gmra.mxu0 %v1086
        %v1125 = vpop.f32.mrf.mxu0
        %v1126 = vadd.f32 0.0, %v1125
        %v1127 = vpop.f32.mrf.mxu0
        %v1128 = vpop.f32.mrf.mxu0
        %v1129 = vadd.f32 0.0, %v1128
        %v1130 = vpop.f32.mrf.mxu0
        %1131 = vdwg.mxu0
        %v1132 = vsel %vm1010, %v1126, -inf
        %1133 = vmax.xlane.f32.xlu0 %v1132
        %v1134 = vpop.xlane.xlu0 %1133
        %v1135 = vsel %vm1010, %v1129, -inf
        %1136 = vmax.xlane.f32.xlu0 %v1135
        %v1137 = vpop.xlane.xlu0 %1136
        %v1138 = vsub.f32 %v1126, %v1134
        %v1139 = vsub.f32 %v1129, %v1137
        %v1140 = vmul.f32 %v1138, 1.442695
        %v1141 = vpow.pop %v1140
        %v1142 = vmul.f32 %v1139, 1.442695
        %v1143 = vpow.pop %v1142
        %v1144 = vsel %vm1010, %v1141, 0.0
        %1145 = vadd.xlane.f32.xlu0 %v1144
        %v1146 = vpop.xlane.xlu0 %1145
        %v1147 = vsel %vm1010, %v1143, 0.0
        %1148 = vadd.xlane.f32.xlu0 %v1147
        %v1149 = vpop.xlane.xlu0 %1148
        %v1150 = vpack.c.bf16 %v1143, %v1141
        %1152 = vrot.lane.b32.xlu0 %v960, 96
        %v1153 = vpop.permute.xlu0 %1152
        %v1156 = vsel %vm1010, %v1150, 0
        %1158 = vmatprep.subr.bf16.mxu0 0
        %1159 = vmatpush1.bf16.msra.mxu0 0
        %1160 = vmatprep.subr.bf16.mxu0 0
        %1161 = vmatpush1.bf16.msra.mxu0 0
        %1162 = vmatprep.subr.bf16.mxu0 0
        %1163 = vmatpush1.bf16.msra.mxu0 0
        %1164 = vmatprep.subr.bf16.mxu0 0
        %1165 = vmatpush1.bf16.msra.mxu0 0
        %1166 = vmatprep.subr.bf16.mxu0 0
        %1167 = vmatpush1.bf16.msra.mxu0 0
        %1168 = vmatprep.subr.bf16.mxu0 0
        %1169 = vmatpush1.bf16.msra.mxu0 0
        %1170 = vmatprep.subr.bf16.mxu0 0
        %1171 = vmatpush1.bf16.msra.mxu0 0
        %1172 = vmatprep.subr.bf16.mxu0 0
        %1173 = vmatpush1.bf16.msra.mxu0 %v1153
        %1174 = vmatprep.subr.bf16.mxu0 0
        %1175 = vmatpush2.bf16.msra.mxu0 0
        %1176 = vmatprep.subr.bf16.mxu0 0
        %1177 = vmatpush2.bf16.msra.mxu0 0
        %1178 = vmatprep.subr.bf16.mxu0 0
        %1179 = vmatpush2.bf16.msra.mxu0 0
        %1180 = vmatprep.subr.bf16.mxu0 0
        %1181 = vmatpush2.bf16.msra.mxu0 0
        %1182 = vmatprep.subr.bf16.mxu0 0
        %1183 = vmatpush2.bf16.msra.mxu0 0
        %1184 = vmatprep.subr.bf16.mxu0 0
        %1185 = vmatpush2.bf16.msra.mxu0 0
        %1186 = vmatprep.subr.bf16.mxu0 0
        %1187 = vmatpush2.bf16.msra.mxu0 0
        %1188 = vmatprep.subr.bf16.mxu0 0
        %1189 = vmatpush2.bf16.msra.mxu0 0
        %1190 = vmatprep.mubr.bf16.mxu0 0
        %1191 = vmatmul.mubr.bf16.gmra.mxu0 %v1156
        %v1192 = vpop.f32.mrf.mxu0
        %v1193 = vadd.f32 0.0, %v1192
        %v1194 = vpop.f32.mrf.mxu0
        %v1195 = vpop.f32.mrf.mxu0
        %v1196 = vadd.f32 0.0, %v1195
        %v1197 = vpop.f32.mrf.mxu0
        %1198 = vdwg.mxu0
        %v1199 = vrcp.pop %v1146
        %v1200 = vrcp.pop %v1149
        %v1201 = vmul.f32 %v1193, %v1199
        %v1202 = vmul.f32 %v1196, %v1200
        %v1203 = vpack.c.bf16 %v1202, %v1201
        %1204 = vrot.lane.b32.xlu0 %v956, 64
        %v1205 = vpop.permute.xlu0 %1204
        %1206 = vrot.lane.b32.xlu0 %v958, 64
        %v1207 = vpop.permute.xlu0 %1206
        %v1209 = vsel %vm962, %v1205, 0
        %v1212 = vsel %vm962, %v1207, 0
        %1214 = vmatprep.subr.bf16.mxu0 0
        %1215 = vmatpush1.bf16.xpose.msra.mxu0 0
        %1216 = vmatprep.subr.bf16.mxu0 0
        %1217 = vmatpush1.bf16.xpose.msra.mxu0 0
        %1218 = vmatprep.subr.bf16.mxu0 0
        %1219 = vmatpush1.bf16.xpose.msra.mxu0 0
        %1220 = vmatprep.subr.bf16.mxu0 0
        %1221 = vmatpush1.bf16.xpose.msra.mxu0 0
        %1222 = vmatprep.subr.bf16.mxu0 0
        %1223 = vmatpush1.bf16.xpose.msra.mxu0 0
        %1224 = vmatprep.subr.bf16.mxu0 0
        %1225 = vmatpush1.bf16.xpose.msra.mxu0 0
        %1226 = vmatprep.subr.bf16.mxu0 0
        %1227 = vmatpush1.bf16.xpose.msra.mxu0 0
        %1228 = vmatprep.subr.bf16.mxu0 0
        %1229 = vmatpush1.bf16.xpose.msra.mxu0 %v1212
        %1230 = vmatprep.subr.bf16.mxu0 0
        %1231 = vmatpush2.bf16.xpose.msra.mxu0 0
        %1232 = vmatprep.subr.bf16.mxu0 0
        %1233 = vmatpush2.bf16.xpose.msra.mxu0 0
        %1234 = vmatprep.subr.bf16.mxu0 0
        %1235 = vmatpush2.bf16.xpose.msra.mxu0 0
        %1236 = vmatprep.subr.bf16.mxu0 0
        %1237 = vmatpush2.bf16.xpose.msra.mxu0 0
        %1238 = vmatprep.subr.bf16.mxu0 0
        %1239 = vmatpush2.bf16.xpose.msra.mxu0 0
        %1240 = vmatprep.subr.bf16.mxu0 0
        %1241 = vmatpush2.bf16.xpose.msra.mxu0 0
        %1242 = vmatprep.subr.bf16.mxu0 0
        %1243 = vmatpush2.bf16.xpose.msra.mxu0 0
        %1244 = vmatprep.subr.bf16.mxu0 0
        %1245 = vmatpush2.bf16.xpose.msra.mxu0 0
        %1246 = vmatprep.mubr.bf16.mxu0 0
        %1247 = vmatmul.mubr.bf16.gmra.mxu0 %v1209
        %v1248 = vpop.f32.mrf.mxu0
        %v1249 = vadd.f32 0.0, %v1248
        %v1250 = vpop.f32.mrf.mxu0
        %v1251 = vpop.f32.mrf.mxu0
        %v1252 = vadd.f32 0.0, %v1251
        %v1253 = vpop.f32.mrf.mxu0
        %1254 = vdwg.mxu0
        %v1255 = vsel %vm1010, %v1249, -inf
        %1256 = vmax.xlane.f32.xlu0 %v1255
        %v1257 = vpop.xlane.xlu0 %1256
        %v1258 = vsel %vm1010, %v1252, -inf
        %1259 = vmax.xlane.f32.xlu0 %v1258
        %v1260 = vpop.xlane.xlu0 %1259
        %v1261 = vsub.f32 %v1249, %v1257
        %v1262 = vsub.f32 %v1252, %v1260
        %v1263 = vmul.f32 %v1261, 1.442695
        %v1264 = vpow.pop %v1263
        %v1265 = vmul.f32 %v1262, 1.442695
        %v1266 = vpow.pop %v1265
        %v1267 = vsel %vm1010, %v1264, 0.0
        %1268 = vadd.xlane.f32.xlu0 %v1267
        %v1269 = vpop.xlane.xlu0 %1268
        %v1270 = vsel %vm1010, %v1266, 0.0
        %1271 = vadd.xlane.f32.xlu0 %v1270
        %v1272 = vpop.xlane.xlu0 %1271
        %v1273 = vpack.c.bf16 %v1266, %v1264
        %1274 = vrot.lane.b32.xlu0 %v960, 64
        %v1275 = vpop.permute.xlu0 %1274
        %v1278 = vsel %vm1010, %v1273, 0
        %1280 = vmatprep.subr.bf16.mxu0 0
        %1281 = vmatpush1.bf16.msra.mxu0 0
        %1282 = vmatprep.subr.bf16.mxu0 0
        %1283 = vmatpush1.bf16.msra.mxu0 0
        %1284 = vmatprep.subr.bf16.mxu0 0
        %1285 = vmatpush1.bf16.msra.mxu0 0
        %1286 = vmatprep.subr.bf16.mxu0 0
        %1287 = vmatpush1.bf16.msra.mxu0 0
        %1288 = vmatprep.subr.bf16.mxu0 0
        %1289 = vmatpush1.bf16.msra.mxu0 0
        %1290 = vmatprep.subr.bf16.mxu0 0
        %1291 = vmatpush1.bf16.msra.mxu0 0
        %1292 = vmatprep.subr.bf16.mxu0 0
        %1293 = vmatpush1.bf16.msra.mxu0 0
        %1294 = vmatprep.subr.bf16.mxu0 0
        %1295 = vmatpush1.bf16.msra.mxu0 %v1275
        %1296 = vmatprep.subr.bf16.mxu0 0
        %1297 = vmatpush2.bf16.msra.mxu0 0
        %1298 = vmatprep.subr.bf16.mxu0 0
        %1299 = vmatpush2.bf16.msra.mxu0 0
        %1300 = vmatprep.subr.bf16.mxu0 0
        %1301 = vmatpush2.bf16.msra.mxu0 0
        %1302 = vmatprep.subr.bf16.mxu0 0
        %1303 = vmatpush2.bf16.msra.mxu0 0
        %1304 = vmatprep.subr.bf16.mxu0 0
        %1305 = vmatpush2.bf16.msra.mxu0 0
        %1306 = vmatprep.subr.bf16.mxu0 0
        %1307 = vmatpush2.bf16.msra.mxu0 0
        %1308 = vmatprep.subr.bf16.mxu0 0
        %1309 = vmatpush2.bf16.msra.mxu0 0
        %1310 = vmatprep.subr.bf16.mxu0 0
        %1311 = vmatpush2.bf16.msra.mxu0 0
        %1312 = vmatprep.mubr.bf16.mxu0 0
        %1313 = vmatmul.mubr.bf16.gmra.mxu0 %v1278
        %v1314 = vpop.f32.mrf.mxu0
        %v1315 = vadd.f32 0.0, %v1314
        %v1316 = vpop.f32.mrf.mxu0
        %v1317 = vpop.f32.mrf.mxu0
        %v1318 = vadd.f32 0.0, %v1317
        %v1319 = vpop.f32.mrf.mxu0
        %1320 = vdwg.mxu0
        %v1321 = vrcp.pop %v1269
        %v1322 = vrcp.pop %v1272
        %v1323 = vmul.f32 %v1315, %v1321
        %v1324 = vmul.f32 %v1318, %v1322
        %v1325 = vpack.c.bf16 %v1324, %v1323
        %1326 = vrot.lane.b32.xlu0 %v956, 32
        %v1327 = vpop.permute.xlu0 %1326
        %1328 = vrot.lane.b32.xlu0 %v958, 32
        %v1329 = vpop.permute.xlu0 %1328
        %v1331 = vsel %vm962, %v1327, 0
        %v1334 = vsel %vm962, %v1329, 0
        %1336 = vmatprep.subr.bf16.mxu0 0
        %1337 = vmatpush1.bf16.xpose.msra.mxu0 0
        %1338 = vmatprep.subr.bf16.mxu0 0
        %1339 = vmatpush1.bf16.xpose.msra.mxu0 0
        %1340 = vmatprep.subr.bf16.mxu0 0
        %1341 = vmatpush1.bf16.xpose.msra.mxu0 0
        %1342 = vmatprep.subr.bf16.mxu0 0
        %1343 = vmatpush1.bf16.xpose.msra.mxu0 0
        %1344 = vmatprep.subr.bf16.mxu0 0
        %1345 = vmatpush1.bf16.xpose.msra.mxu0 0
        %1346 = vmatprep.subr.bf16.mxu0 0
        %1347 = vmatpush1.bf16.xpose.msra.mxu0 0
        %1348 = vmatprep.subr.bf16.mxu0 0
        %1349 = vmatpush1.bf16.xpose.msra.mxu0 0
        %1350 = vmatprep.subr.bf16.mxu0 0
        %1351 = vmatpush1.bf16.xpose.msra.mxu0 %v1334
        %1352 = vmatprep.subr.bf16.mxu0 0
        %1353 = vmatpush2.bf16.xpose.msra.mxu0 0
        %1354 = vmatprep.subr.bf16.mxu0 0
        %1355 = vmatpush2.bf16.xpose.msra.mxu0 0
        %1356 = vmatprep.subr.bf16.mxu0 0
        %1357 = vmatpush2.bf16.xpose.msra.mxu0 0
        %1358 = vmatprep.subr.bf16.mxu0 0
        %1359 = vmatpush2.bf16.xpose.msra.mxu0 0
        %1360 = vmatprep.subr.bf16.mxu0 0
        %1361 = vmatpush2.bf16.xpose.msra.mxu0 0
        %1362 = vmatprep.subr.bf16.mxu0 0
        %1363 = vmatpush2.bf16.xpose.msra.mxu0 0
        %1364 = vmatprep.subr.bf16.mxu0 0
        %1365 = vmatpush2.bf16.xpose.msra.mxu0 0
        %1366 = vmatprep.subr.bf16.mxu0 0
        %1367 = vmatpush2.bf16.xpose.msra.mxu0 0
        %1368 = vmatprep.mubr.bf16.mxu0 0
        %1369 = vmatmul.mubr.bf16.gmra.mxu0 %v1331
        %v1370 = vpop.f32.mrf.mxu0
        %v1371 = vadd.f32 0.0, %v1370
        %v1372 = vpop.f32.mrf.mxu0
        %v1373 = vpop.f32.mrf.mxu0
        %v1374 = vadd.f32 0.0, %v1373
        %v1375 = vpop.f32.mrf.mxu0
        %1376 = vdwg.mxu0
        %v1377 = vsel %vm1010, %v1371, -inf
        %1378 = vmax.xlane.f32.xlu0 %v1377
        %v1379 = vpop.xlane.xlu0 %1378
        %v1380 = vsel %vm1010, %v1374, -inf
        %1381 = vmax.xlane.f32.xlu0 %v1380
        %v1382 = vpop.xlane.xlu0 %1381
        %v1383 = vsub.f32 %v1371, %v1379
        %v1384 = vsub.f32 %v1374, %v1382
        %v1385 = vmul.f32 %v1383, 1.442695
        %v1386 = vpow.pop %v1385
        %v1387 = vmul.f32 %v1384, 1.442695
        %v1388 = vpow.pop %v1387
        %v1389 = vsel %vm1010, %v1386, 0.0
        %1390 = vadd.xlane.f32.xlu0 %v1389
        %v1391 = vpop.xlane.xlu0 %1390
        %v1392 = vsel %vm1010, %v1388, 0.0
        %1393 = vadd.xlane.f32.xlu0 %v1392
        %v1394 = vpop.xlane.xlu0 %1393
        %v1395 = vpack.c.bf16 %v1388, %v1386
        %1396 = vrot.lane.b32.xlu0 %v960, 32
        %v1397 = vpop.permute.xlu0 %1396
        %v1400 = vsel %vm1010, %v1395, 0
        %1402 = vmatprep.subr.bf16.mxu0 0
        %1403 = vmatpush1.bf16.msra.mxu0 0
        %1404 = vmatprep.subr.bf16.mxu0 0
        %1405 = vmatpush1.bf16.msra.mxu0 0
        %1406 = vmatprep.subr.bf16.mxu0 0
        %1407 = vmatpush1.bf16.msra.mxu0 0
        %1408 = vmatprep.subr.bf16.mxu0 0
        %1409 = vmatpush1.bf16.msra.mxu0 0
        %1410 = vmatprep.subr.bf16.mxu0 0
        %1411 = vmatpush1.bf16.msra.mxu0 0
        %1412 = vmatprep.subr.bf16.mxu0 0
        %1413 = vmatpush1.bf16.msra.mxu0 0
        %1414 = vmatprep.subr.bf16.mxu0 0
        %1415 = vmatpush1.bf16.msra.mxu0 0
        %1416 = vmatprep.subr.bf16.mxu0 0
        %1417 = vmatpush1.bf16.msra.mxu0 %v1397
        %1418 = vmatprep.subr.bf16.mxu0 0
        %1419 = vmatpush2.bf16.msra.mxu0 0
        %1420 = vmatprep.subr.bf16.mxu0 0
        %1421 = vmatpush2.bf16.msra.mxu0 0
        %1422 = vmatprep.subr.bf16.mxu0 0
        %1423 = vmatpush2.bf16.msra.mxu0 0
        %1424 = vmatprep.subr.bf16.mxu0 0
        %1425 = vmatpush2.bf16.msra.mxu0 0
        %1426 = vmatprep.subr.bf16.mxu0 0
        %1427 = vmatpush2.bf16.msra.mxu0 0
        %1428 = vmatprep.subr.bf16.mxu0 0
        %1429 = vmatpush2.bf16.msra.mxu0 0
        %1430 = vmatprep.subr.bf16.mxu0 0
        %1431 = vmatpush2.bf16.msra.mxu0 0
        %1432 = vmatprep.subr.bf16.mxu0 0
        %1433 = vmatpush2.bf16.msra.mxu0 0
        %1434 = vmatprep.mubr.bf16.mxu0 0
        %1435 = vmatmul.mubr.bf16.gmra.mxu0 %v1400
        %v1436 = vpop.f32.mrf.mxu0
        %v1437 = vadd.f32 0.0, %v1436
        %v1438 = vpop.f32.mrf.mxu0
        %v1439 = vpop.f32.mrf.mxu0
        %v1440 = vadd.f32 0.0, %v1439
        %v1441 = vpop.f32.mrf.mxu0
        %1442 = vdwg.mxu0
        %v1443 = vrcp.pop %v1391
        %v1444 = vrcp.pop %v1394
        %v1445 = vmul.f32 %v1437, %v1443
        %v1446 = vmul.f32 %v1440, %v1444
        %v1447 = vpack.c.bf16 %v1446, %v1445
        %1449 = vrot.lane.b32.xlu0 %v1203, 32
        %v1450 = vpop.permute.xlu0 %1449
        %1452 = vrot.lane.b32.xlu0 %v1325, 64
        %v1453 = vpop.permute.xlu0 %1452
        %1455 = vrot.lane.b32.xlu0 %v1447, 96
        %v1456 = vpop.permute.xlu0 %1455
        %v1459 = vsel %vm962, %v1078, %v1450
        %vm1460 = vcmask 523264
        %v1462 = vsel %vm1460, %v1459, %v1453
        %vm1463 = vcmask 785408
        %v1465 = vsel %vm1463, %v1462, %v1456
        %v1468 = vsel %vm962, %v957, 0
        %v1471 = vsel %vm962, %v959, 0
        %1473 = vmatprep.subr.bf16.mxu0 0
        %1474 = vmatpush1.bf16.xpose.msra.mxu0 0
        %1475 = vmatprep.subr.bf16.mxu0 0
        %1476 = vmatpush1.bf16.xpose.msra.mxu0 0
        %1477 = vmatprep.subr.bf16.mxu0 0
        %1478 = vmatpush1.bf16.xpose.msra.mxu0 0
        %1479 = vmatprep.subr.bf16.mxu0 0
        %1480 = vmatpush1.bf16.xpose.msra.mxu0 0
        %1481 = vmatprep.subr.bf16.mxu0 0
        %1482 = vmatpush1.bf16.xpose.msra.mxu0 0
        %1483 = vmatprep.subr.bf16.mxu0 0
        %1484 = vmatpush1.bf16.xpose.msra.mxu0 0
        %1485 = vmatprep.subr.bf16.mxu0 0
        %1486 = vmatpush1.bf16.xpose.msra.mxu0 0
        %1487 = vmatprep.subr.bf16.mxu0 0
        %1488 = vmatpush1.bf16.xpose.msra.mxu0 %v1471
        %1489 = vmatprep.subr.bf16.mxu0 0
        %1490 = vmatpush2.bf16.xpose.msra.mxu0 0
        %1491 = vmatprep.subr.bf16.mxu0 0
        %1492 = vmatpush2.bf16.xpose.msra.mxu0 0
        %1493 = vmatprep.subr.bf16.mxu0 0
        %1494 = vmatpush2.bf16.xpose.msra.mxu0 0
        %1495 = vmatprep.subr.bf16.mxu0 0
        %1496 = vmatpush2.bf16.xpose.msra.mxu0 0
        %1497 = vmatprep.subr.bf16.mxu0 0
        %1498 = vmatpush2.bf16.xpose.msra.mxu0 0
        %1499 = vmatprep.subr.bf16.mxu0 0
        %1500 = vmatpush2.bf16.xpose.msra.mxu0 0
        %1501 = vmatprep.subr.bf16.mxu0 0
        %1502 = vmatpush2.bf16.xpose.msra.mxu0 0
        %1503 = vmatprep.subr.bf16.mxu0 0
        %1504 = vmatpush2.bf16.xpose.msra.mxu0 0
        %1505 = vmatprep.mubr.bf16.mxu0 0
        %1506 = vmatmul.mubr.bf16.gmra.mxu0 %v1468
        %v1507 = vpop.f32.mrf.mxu0
        %v1508 = vadd.f32 0.0, %v1507
        %v1509 = vpop.f32.mrf.mxu0
        %v1510 = vpop.f32.mrf.mxu0
        %v1511 = vadd.f32 0.0, %v1510
        %v1512 = vpop.f32.mrf.mxu0
        %1513 = vdwg.mxu0
        %v1514 = vsel %vm1010, %v1508, -inf
        %1515 = vmax.xlane.f32.xlu0 %v1514
        %v1516 = vpop.xlane.xlu0 %1515
        %v1517 = vsel %vm1010, %v1511, -inf
        %1518 = vmax.xlane.f32.xlu0 %v1517
        %v1519 = vpop.xlane.xlu0 %1518
        %v1520 = vsub.f32 %v1508, %v1516
        %v1521 = vsub.f32 %v1511, %v1519
        %v1522 = vmul.f32 %v1520, 1.442695
        %v1523 = vpow.pop %v1522
        %v1524 = vmul.f32 %v1521, 1.442695
        %v1525 = vpow.pop %v1524
        %v1526 = vsel %vm1010, %v1523, 0.0
        %1527 = vadd.xlane.f32.xlu0 %v1526
        %v1528 = vpop.xlane.xlu0 %1527
        %v1529 = vsel %vm1010, %v1525, 0.0
        %1530 = vadd.xlane.f32.xlu0 %v1529
        %v1531 = vpop.xlane.xlu0 %1530
        %v1532 = vpack.c.bf16 %v1525, %v1523
        %v1534 = vsel %vm1010, %v1532, 0
        %1536 = vmatprep.subr.bf16.mxu0 0
        %1537 = vmatpush1.bf16.msra.mxu0 0
        %1538 = vmatprep.subr.bf16.mxu0 0
        %1539 = vmatpush1.bf16.msra.mxu0 0
        %1540 = vmatprep.subr.bf16.mxu0 0
        %1541 = vmatpush1.bf16.msra.mxu0 0
        %1542 = vmatprep.subr.bf16.mxu0 0
        %1543 = vmatpush1.bf16.msra.mxu0 0
        %1544 = vmatprep.subr.bf16.mxu0 0
        %1545 = vmatpush1.bf16.msra.mxu0 0
        %1546 = vmatprep.subr.bf16.mxu0 0
        %1547 = vmatpush1.bf16.msra.mxu0 0
        %1548 = vmatprep.subr.bf16.mxu0 0
        %1549 = vmatpush1.bf16.msra.mxu0 0
        %1550 = vmatprep.subr.bf16.mxu0 0
        %1551 = vmatpush1.bf16.msra.mxu0 %v961
        %1552 = vmatprep.subr.bf16.mxu0 0
        %1553 = vmatpush2.bf16.msra.mxu0 0
        %1554 = vmatprep.subr.bf16.mxu0 0
        %1555 = vmatpush2.bf16.msra.mxu0 0
        %1556 = vmatprep.subr.bf16.mxu0 0
        %1557 = vmatpush2.bf16.msra.mxu0 0
        %1558 = vmatprep.subr.bf16.mxu0 0
        %1559 = vmatpush2.bf16.msra.mxu0 0
        %1560 = vmatprep.subr.bf16.mxu0 0
        %1561 = vmatpush2.bf16.msra.mxu0 0
        %1562 = vmatprep.subr.bf16.mxu0 0
        %1563 = vmatpush2.bf16.msra.mxu0 0
        %1564 = vmatprep.subr.bf16.mxu0 0
        %1565 = vmatpush2.bf16.msra.mxu0 0
        %1566 = vmatprep.subr.bf16.mxu0 0
        %1567 = vmatpush2.bf16.msra.mxu0 0
        %1568 = vmatprep.mubr.bf16.mxu0 0
        %1569 = vmatmul.mubr.bf16.gmra.mxu0 %v1534
        %v1570 = vpop.f32.mrf.mxu0
        %v1571 = vadd.f32 0.0, %v1570
        %v1572 = vpop.f32.mrf.mxu0
        %v1573 = vpop.f32.mrf.mxu0
        %v1574 = vadd.f32 0.0, %v1573
        %v1575 = vpop.f32.mrf.mxu0
        %1576 = vdwg.mxu0
        %v1577 = vrcp.pop %v1528
        %v1578 = vrcp.pop %v1531
        %v1579 = vmul.f32 %v1571, %v1577
        %v1580 = vmul.f32 %v1574, %v1578
        %v1581 = vpack.c.bf16 %v1580, %v1579
        %1583 = vrot.lane.b32.xlu0 %v957, 96
        %v1584 = vpop.permute.xlu0 %1583
        %1586 = vrot.lane.b32.xlu0 %v959, 96
        %v1587 = vpop.permute.xlu0 %1586
        %v1589 = vsel %vm962, %v1584, 0
        %v1592 = vsel %vm962, %v1587, 0
        %1594 = vmatprep.subr.bf16.mxu0 0
        %1595 = vmatpush1.bf16.xpose.msra.mxu0 0
        %1596 = vmatprep.subr.bf16.mxu0 0
        %1597 = vmatpush1.bf16.xpose.msra.mxu0 0
        %1598 = vmatprep.subr.bf16.mxu0 0
        %1599 = vmatpush1.bf16.xpose.msra.mxu0 0
        %1600 = vmatprep.subr.bf16.mxu0 0
        %1601 = vmatpush1.bf16.xpose.msra.mxu0 0
        %1602 = vmatprep.subr.bf16.mxu0 0
        %1603 = vmatpush1.bf16.xpose.msra.mxu0 0
        %1604 = vmatprep.subr.bf16.mxu0 0
        %1605 = vmatpush1.bf16.xpose.msra.mxu0 0
        %1606 = vmatprep.subr.bf16.mxu0 0
        %1607 = vmatpush1.bf16.xpose.msra.mxu0 0
        %1608 = vmatprep.subr.bf16.mxu0 0
        %1609 = vmatpush1.bf16.xpose.msra.mxu0 %v1592
        %1610 = vmatprep.subr.bf16.mxu0 0
        %1611 = vmatpush2.bf16.xpose.msra.mxu0 0
        %1612 = vmatprep.subr.bf16.mxu0 0
        %1613 = vmatpush2.bf16.xpose.msra.mxu0 0
        %1614 = vmatprep.subr.bf16.mxu0 0
        %1615 = vmatpush2.bf16.xpose.msra.mxu0 0
        %1616 = vmatprep.subr.bf16.mxu0 0
        %1617 = vmatpush2.bf16.xpose.msra.mxu0 0
        %1618 = vmatprep.subr.bf16.mxu0 0
        %1619 = vmatpush2.bf16.xpose.msra.mxu0 0
        %1620 = vmatprep.subr.bf16.mxu0 0
        %1621 = vmatpush2.bf16.xpose.msra.mxu0 0
        %1622 = vmatprep.subr.bf16.mxu0 0
        %1623 = vmatpush2.bf16.xpose.msra.mxu0 0
        %1624 = vmatprep.subr.bf16.mxu0 0
        %1625 = vmatpush2.bf16.xpose.msra.mxu0 0
        %1626 = vmatprep.mubr.bf16.mxu0 0
        %1627 = vmatmul.mubr.bf16.gmra.mxu0 %v1589
        %v1628 = vpop.f32.mrf.mxu0
        %v1629 = vadd.f32 0.0, %v1628
        %v1630 = vpop.f32.mrf.mxu0
        %v1631 = vpop.f32.mrf.mxu0
        %v1632 = vadd.f32 0.0, %v1631
        %v1633 = vpop.f32.mrf.mxu0
        %1634 = vdwg.mxu0
        %v1635 = vsel %vm1010, %v1629, -inf
        %1636 = vmax.xlane.f32.xlu0 %v1635
        %v1637 = vpop.xlane.xlu0 %1636
        %v1638 = vsel %vm1010, %v1632, -inf
        %1639 = vmax.xlane.f32.xlu0 %v1638
        %v1640 = vpop.xlane.xlu0 %1639
        %v1641 = vsub.f32 %v1629, %v1637
        %v1642 = vsub.f32 %v1632, %v1640
        %v1643 = vmul.f32 %v1641, 1.442695
        %v1644 = vpow.pop %v1643
        %v1645 = vmul.f32 %v1642, 1.442695
        %v1646 = vpow.pop %v1645
        %v1647 = vsel %vm1010, %v1644, 0.0
        %1648 = vadd.xlane.f32.xlu0 %v1647
        %v1649 = vpop.xlane.xlu0 %1648
        %v1650 = vsel %vm1010, %v1646, 0.0
        %1651 = vadd.xlane.f32.xlu0 %v1650
        %v1652 = vpop.xlane.xlu0 %1651
        %v1653 = vpack.c.bf16 %v1646, %v1644
        %1655 = vrot.lane.b32.xlu0 %v961, 96
        %v1656 = vpop.permute.xlu0 %1655
        %v1659 = vsel %vm1010, %v1653, 0
        %1661 = vmatprep.subr.bf16.mxu0 0
        %1662 = vmatpush1.bf16.msra.mxu0 0
        %1663 = vmatprep.subr.bf16.mxu0 0
        %1664 = vmatpush1.bf16.msra.mxu0 0
        %1665 = vmatprep.subr.bf16.mxu0 0
        %1666 = vmatpush1.bf16.msra.mxu0 0
        %1667 = vmatprep.subr.bf16.mxu0 0
        %1668 = vmatpush1.bf16.msra.mxu0 0
        %1669 = vmatprep.subr.bf16.mxu0 0
        %1670 = vmatpush1.bf16.msra.mxu0 0
        %1671 = vmatprep.subr.bf16.mxu0 0
        %1672 = vmatpush1.bf16.msra.mxu0 0
        %1673 = vmatprep.subr.bf16.mxu0 0
        %1674 = vmatpush1.bf16.msra.mxu0 0
        %1675 = vmatprep.subr.bf16.mxu0 0
        %1676 = vmatpush1.bf16.msra.mxu0 %v1656
        %1677 = vmatprep.subr.bf16.mxu0 0
        %1678 = vmatpush2.bf16.msra.mxu0 0
        %1679 = vmatprep.subr.bf16.mxu0 0
        %1680 = vmatpush2.bf16.msra.mxu0 0
        %1681 = vmatprep.subr.bf16.mxu0 0
        %1682 = vmatpush2.bf16.msra.mxu0 0
        %1683 = vmatprep.subr.bf16.mxu0 0
        %1684 = vmatpush2.bf16.msra.mxu0 0
        %1685 = vmatprep.subr.bf16.mxu0 0
        %1686 = vmatpush2.bf16.msra.mxu0 0
        %1687 = vmatprep.subr.bf16.mxu0 0
        %1688 = vmatpush2.bf16.msra.mxu0 0
        %1689 = vmatprep.subr.bf16.mxu0 0
        %1690 = vmatpush2.bf16.msra.mxu0 0
        %1691 = vmatprep.subr.bf16.mxu0 0
        %1692 = vmatpush2.bf16.msra.mxu0 0
        %1693 = vmatprep.mubr.bf16.mxu0 0
        %1694 = vmatmul.mubr.bf16.gmra.mxu0 %v1659
        %v1695 = vpop.f32.mrf.mxu0
        %v1696 = vadd.f32 0.0, %v1695
        %v1697 = vpop.f32.mrf.mxu0
        %v1698 = vpop.f32.mrf.mxu0
        %v1699 = vadd.f32 0.0, %v1698
        %v1700 = vpop.f32.mrf.mxu0
        %1701 = vdwg.mxu0
        %v1702 = vrcp.pop %v1649
        %v1703 = vrcp.pop %v1652
        %v1704 = vmul.f32 %v1696, %v1702
        %v1705 = vmul.f32 %v1699, %v1703
        %v1706 = vpack.c.bf16 %v1705, %v1704
        %1707 = vrot.lane.b32.xlu0 %v957, 64
        %v1708 = vpop.permute.xlu0 %1707
        %1709 = vrot.lane.b32.xlu0 %v959, 64
        %v1710 = vpop.permute.xlu0 %1709
        %v1712 = vsel %vm962, %v1708, 0
        %v1715 = vsel %vm962, %v1710, 0
        %1717 = vmatprep.subr.bf16.mxu0 0
        %1718 = vmatpush1.bf16.xpose.msra.mxu0 0
        %1719 = vmatprep.subr.bf16.mxu0 0
        %1720 = vmatpush1.bf16.xpose.msra.mxu0 0
        %1721 = vmatprep.subr.bf16.mxu0 0
        %1722 = vmatpush1.bf16.xpose.msra.mxu0 0
        %1723 = vmatprep.subr.bf16.mxu0 0
        %1724 = vmatpush1.bf16.xpose.msra.mxu0 0
        %1725 = vmatprep.subr.bf16.mxu0 0
        %1726 = vmatpush1.bf16.xpose.msra.mxu0 0
        %1727 = vmatprep.subr.bf16.mxu0 0
        %1728 = vmatpush1.bf16.xpose.msra.mxu0 0
        %1729 = vmatprep.subr.bf16.mxu0 0
        %1730 = vmatpush1.bf16.xpose.msra.mxu0 0
        %1731 = vmatprep.subr.bf16.mxu0 0
        %1732 = vmatpush1.bf16.xpose.msra.mxu0 %v1715
        %1733 = vmatprep.subr.bf16.mxu0 0
        %1734 = vmatpush2.bf16.xpose.msra.mxu0 0
        %1735 = vmatprep.subr.bf16.mxu0 0
        %1736 = vmatpush2.bf16.xpose.msra.mxu0 0
        %1737 = vmatprep.subr.bf16.mxu0 0
        %1738 = vmatpush2.bf16.xpose.msra.mxu0 0
        %1739 = vmatprep.subr.bf16.mxu0 0
        %1740 = vmatpush2.bf16.xpose.msra.mxu0 0
        %1741 = vmatprep.subr.bf16.mxu0 0
        %1742 = vmatpush2.bf16.xpose.msra.mxu0 0
        %1743 = vmatprep.subr.bf16.mxu0 0
        %1744 = vmatpush2.bf16.xpose.msra.mxu0 0
        %1745 = vmatprep.subr.bf16.mxu0 0
        %1746 = vmatpush2.bf16.xpose.msra.mxu0 0
        %1747 = vmatprep.subr.bf16.mxu0 0
        %1748 = vmatpush2.bf16.xpose.msra.mxu0 0
        %1749 = vmatprep.mubr.bf16.mxu0 0
        %1750 = vmatmul.mubr.bf16.gmra.mxu0 %v1712
        %v1751 = vpop.f32.mrf.mxu0
        %v1752 = vadd.f32 0.0, %v1751
        %v1753 = vpop.f32.mrf.mxu0
        %v1754 = vpop.f32.mrf.mxu0
        %v1755 = vadd.f32 0.0, %v1754
        %v1756 = vpop.f32.mrf.mxu0
        %1757 = vdwg.mxu0
        %v1758 = vsel %vm1010, %v1752, -inf
        %1759 = vmax.xlane.f32.xlu0 %v1758
        %v1760 = vpop.xlane.xlu0 %1759
        %v1761 = vsel %vm1010, %v1755, -inf
        %1762 = vmax.xlane.f32.xlu0 %v1761
        %v1763 = vpop.xlane.xlu0 %1762
        %v1764 = vsub.f32 %v1752, %v1760
        %v1765 = vsub.f32 %v1755, %v1763
        %v1766 = vmul.f32 %v1764, 1.442695
        %v1767 = vpow.pop %v1766
        %v1768 = vmul.f32 %v1765, 1.442695
        %v1769 = vpow.pop %v1768
        %v1770 = vsel %vm1010, %v1767, 0.0
        %1771 = vadd.xlane.f32.xlu0 %v1770
        %v1772 = vpop.xlane.xlu0 %1771
        %v1773 = vsel %vm1010, %v1769, 0.0
        %1774 = vadd.xlane.f32.xlu0 %v1773
        %v1775 = vpop.xlane.xlu0 %1774
        %v1776 = vpack.c.bf16 %v1769, %v1767
        %1777 = vrot.lane.b32.xlu0 %v961, 64
        %v1778 = vpop.permute.xlu0 %1777
        %v1781 = vsel %vm1010, %v1776, 0
        %1783 = vmatprep.subr.bf16.mxu0 0
        %1784 = vmatpush1.bf16.msra.mxu0 0
        %1785 = vmatprep.subr.bf16.mxu0 0
        %1786 = vmatpush1.bf16.msra.mxu0 0
        %1787 = vmatprep.subr.bf16.mxu0 0
        %1788 = vmatpush1.bf16.msra.mxu0 0
        %1789 = vmatprep.subr.bf16.mxu0 0
        %1790 = vmatpush1.bf16.msra.mxu0 0
        %1791 = vmatprep.subr.bf16.mxu0 0
        %1792 = vmatpush1.bf16.msra.mxu0 0
        %1793 = vmatprep.subr.bf16.mxu0 0
        %1794 = vmatpush1.bf16.msra.mxu0 0
        %1795 = vmatprep.subr.bf16.mxu0 0
        %1796 = vmatpush1.bf16.msra.mxu0 0
        %1797 = vmatprep.subr.bf16.mxu0 0
        %1798 = vmatpush1.bf16.msra.mxu0 %v1778
        %1799 = vmatprep.subr.bf16.mxu0 0
        %1800 = vmatpush2.bf16.msra.mxu0 0
        %1801 = vmatprep.subr.bf16.mxu0 0
        %1802 = vmatpush2.bf16.msra.mxu0 0
        %1803 = vmatprep.subr.bf16.mxu0 0
        %1804 = vmatpush2.bf16.msra.mxu0 0
        %1805 = vmatprep.subr.bf16.mxu0 0
        %1806 = vmatpush2.bf16.msra.mxu0 0
        %1807 = vmatprep.subr.bf16.mxu0 0
        %1808 = vmatpush2.bf16.msra.mxu0 0
        %1809 = vmatprep.subr.bf16.mxu0 0
        %1810 = vmatpush2.bf16.msra.mxu0 0
        %1811 = vmatprep.subr.bf16.mxu0 0
        %1812 = vmatpush2.bf16.msra.mxu0 0
        %1813 = vmatprep.subr.bf16.mxu0 0
        %1814 = vmatpush2.bf16.msra.mxu0 0
        %1815 = vmatprep.mubr.bf16.mxu0 0
        %1816 = vmatmul.mubr.bf16.gmra.mxu0 %v1781
        %v1817 = vpop.f32.mrf.mxu0
        %v1818 = vadd.f32 0.0, %v1817
        %v1819 = vpop.f32.mrf.mxu0
        %v1820 = vpop.f32.mrf.mxu0
        %v1821 = vadd.f32 0.0, %v1820
        %v1822 = vpop.f32.mrf.mxu0
        %1823 = vdwg.mxu0
        %v1824 = vrcp.pop %v1772
        %v1825 = vrcp.pop %v1775
        %v1826 = vmul.f32 %v1818, %v1824
        %v1827 = vmul.f32 %v1821, %v1825
        %v1828 = vpack.c.bf16 %v1827, %v1826
        %1829 = vrot.lane.b32.xlu0 %v957, 32
        %v1830 = vpop.permute.xlu0 %1829
        %1831 = vrot.lane.b32.xlu0 %v959, 32
        %v1832 = vpop.permute.xlu0 %1831
        %v1834 = vsel %vm962, %v1830, 0
        %v1837 = vsel %vm962, %v1832, 0
        %1839 = vmatprep.subr.bf16.mxu0 0
        %1840 = vmatpush1.bf16.xpose.msra.mxu0 0
        %1841 = vmatprep.subr.bf16.mxu0 0
        %1842 = vmatpush1.bf16.xpose.msra.mxu0 0
        %1843 = vmatprep.subr.bf16.mxu0 0
        %1844 = vmatpush1.bf16.xpose.msra.mxu0 0
        %1845 = vmatprep.subr.bf16.mxu0 0
        %1846 = vmatpush1.bf16.xpose.msra.mxu0 0
        %1847 = vmatprep.subr.bf16.mxu0 0
        %1848 = vmatpush1.bf16.xpose.msra.mxu0 0
        %1849 = vmatprep.subr.bf16.mxu0 0
        %1850 = vmatpush1.bf16.xpose.msra.mxu0 0
        %1851 = vmatprep.subr.bf16.mxu0 0
        %1852 = vmatpush1.bf16.xpose.msra.mxu0 0
        %1853 = vmatprep.subr.bf16.mxu0 0
        %1854 = vmatpush1.bf16.xpose.msra.mxu0 %v1837
        %1855 = vmatprep.subr.bf16.mxu0 0
        %1856 = vmatpush2.bf16.xpose.msra.mxu0 0
        %1857 = vmatprep.subr.bf16.mxu0 0
        %1858 = vmatpush2.bf16.xpose.msra.mxu0 0
        %1859 = vmatprep.subr.bf16.mxu0 0
        %1860 = vmatpush2.bf16.xpose.msra.mxu0 0
        %1861 = vmatprep.subr.bf16.mxu0 0
        %1862 = vmatpush2.bf16.xpose.msra.mxu0 0
        %1863 = vmatprep.subr.bf16.mxu0 0
        %1864 = vmatpush2.bf16.xpose.msra.mxu0 0
        %1865 = vmatprep.subr.bf16.mxu0 0
        %1866 = vmatpush2.bf16.xpose.msra.mxu0 0
        %1867 = vmatprep.subr.bf16.mxu0 0
        %1868 = vmatpush2.bf16.xpose.msra.mxu0 0
        %1869 = vmatprep.subr.bf16.mxu0 0
        %1870 = vmatpush2.bf16.xpose.msra.mxu0 0
        %1871 = vmatprep.mubr.bf16.mxu0 0
        %1872 = vmatmul.mubr.bf16.gmra.mxu0 %v1834
        %v1873 = vpop.f32.mrf.mxu0
        %v1874 = vadd.f32 0.0, %v1873
        %v1875 = vpop.f32.mrf.mxu0
        %v1876 = vpop.f32.mrf.mxu0
        %v1877 = vadd.f32 0.0, %v1876
        %v1878 = vpop.f32.mrf.mxu0
        %1879 = vdwg.mxu0
        %v1880 = vsel %vm1010, %v1874, -inf
        %1881 = vmax.xlane.f32.xlu0 %v1880
        %v1882 = vpop.xlane.xlu0 %1881
        %v1883 = vsel %vm1010, %v1877, -inf
        %1884 = vmax.xlane.f32.xlu0 %v1883
        %v1885 = vpop.xlane.xlu0 %1884
        %v1886 = vsub.f32 %v1874, %v1882
        %v1887 = vsub.f32 %v1877, %v1885
        %v1888 = vmul.f32 %v1886, 1.442695
        %v1889 = vpow.pop %v1888
        %v1890 = vmul.f32 %v1887, 1.442695
        %v1891 = vpow.pop %v1890
        %v1892 = vsel %vm1010, %v1889, 0.0
        %1893 = vadd.xlane.f32.xlu0 %v1892
        %v1894 = vpop.xlane.xlu0 %1893
        %v1895 = vsel %vm1010, %v1891, 0.0
        %1896 = vadd.xlane.f32.xlu0 %v1895
        %v1897 = vpop.xlane.xlu0 %1896
        %v1898 = vpack.c.bf16 %v1891, %v1889
        %1899 = vrot.lane.b32.xlu0 %v961, 32
        %v1900 = vpop.permute.xlu0 %1899
        %v1903 = vsel %vm1010, %v1898, 0
        %1905 = vmatprep.subr.bf16.mxu0 0
        %1906 = vmatpush1.bf16.msra.mxu0 0
        %1907 = vmatprep.subr.bf16.mxu0 0
        %1908 = vmatpush1.bf16.msra.mxu0 0
        %1909 = vmatprep.subr.bf16.mxu0 0
        %1910 = vmatpush1.bf16.msra.mxu0 0
        %1911 = vmatprep.subr.bf16.mxu0 0
        %1912 = vmatpush1.bf16.msra.mxu0 0
        %1913 = vmatprep.subr.bf16.mxu0 0
        %1914 = vmatpush1.bf16.msra.mxu0 0
        %1915 = vmatprep.subr.bf16.mxu0 0
        %1916 = vmatpush1.bf16.msra.mxu0 0
        %1917 = vmatprep.subr.bf16.mxu0 0
        %1918 = vmatpush1.bf16.msra.mxu0 0
        %1919 = vmatprep.subr.bf16.mxu0 0
        %1920 = vmatpush1.bf16.msra.mxu0 %v1900
        %1921 = vmatprep.subr.bf16.mxu0 0
        %1922 = vmatpush2.bf16.msra.mxu0 0
        %1923 = vmatprep.subr.bf16.mxu0 0
        %1924 = vmatpush2.bf16.msra.mxu0 0
        %1925 = vmatprep.subr.bf16.mxu0 0
        %1926 = vmatpush2.bf16.msra.mxu0 0
        %1927 = vmatprep.subr.bf16.mxu0 0
        %1928 = vmatpush2.bf16.msra.mxu0 0
        %1929 = vmatprep.subr.bf16.mxu0 0
        %1930 = vmatpush2.bf16.msra.mxu0 0
        %1931 = vmatprep.subr.bf16.mxu0 0
        %1932 = vmatpush2.bf16.msra.mxu0 0
        %1933 = vmatprep.subr.bf16.mxu0 0
        %1934 = vmatpush2.bf16.msra.mxu0 0
        %1935 = vmatprep.subr.bf16.mxu0 0
        %1936 = vmatpush2.bf16.msra.mxu0 0
        %1937 = vmatprep.mubr.bf16.mxu0 0
        %1938 = vmatmul.mubr.bf16.gmra.mxu0 %v1903
        %v1939 = vpop.f32.mrf.mxu0
        %v1940 = vadd.f32 0.0, %v1939
        %v1941 = vpop.f32.mrf.mxu0
        %v1942 = vpop.f32.mrf.mxu0
        %v1943 = vadd.f32 0.0, %v1942
        %v1944 = vpop.f32.mrf.mxu0
        %1945 = vdwg.mxu0
        %v1946 = vrcp.pop %v1894
        %v1947 = vrcp.pop %v1897
        %v1948 = vmul.f32 %v1940, %v1946
        %v1949 = vmul.f32 %v1943, %v1947
        %v1950 = vpack.c.bf16 %v1949, %v1948
        %1952 = vrot.lane.b32.xlu0 %v1706, 32
        %v1953 = vpop.permute.xlu0 %1952
        %1955 = vrot.lane.b32.xlu0 %v1828, 64
        %v1956 = vpop.permute.xlu0 %1955
        %1958 = vrot.lane.b32.xlu0 %v1950, 96
        %v1959 = vpop.permute.xlu0 %1958
        %v1962 = vsel %vm962, %v1581, %v1953
        %v1964 = vsel %vm1460, %v1962, %v1956
        %v1966 = vsel %vm1463, %v1964, %v1959
        %v1968 = vld [vmem:[#allocation13] sm:$0xf]
        %v1969 = vld [vmem:[#allocation13 + $0x4] sm:$0xf]
        %v1970 = vld [vmem:[#allocation13 + $0x8] sm:$0xf]
        %v1971 = vld [vmem:[#allocation13 + $0xc] sm:$0xf]
        %v1972 = vld [vmem:[#allocation13 + $0x10] sm:$0xf]
        %v1973 = vld [vmem:[#allocation13 + $0x14] sm:$0xf]
        %v1974 = vld [vmem:[#allocation13 + $0x18] sm:$0xf]
        %v1975 = vld [vmem:[#allocation13 + $0x1c] sm:$0xf]
        %v1976 = vld [vmem:[#allocation13 + $0x20] sm:$0xf]
        %v1977 = vld [vmem:[#allocation13 + $0x24] sm:$0xf]
        %v1978 = vld [vmem:[#allocation13 + $0x28] sm:$0xf]
        %v1979 = vld [vmem:[#allocation13 + $0x2c] sm:$0xf]
        %v1980 = vld [vmem:[#allocation13 + $0x30] sm:$0xf]
        %v1981 = vld [vmem:[#allocation13 + $0x34] sm:$0xf]
        %v1982 = vld [vmem:[#allocation13 + $0x38] sm:$0xf]
        %v1983 = vld [vmem:[#allocation13 + $0x3c] sm:$0xf]
        %v1984 = vld [vmem:[%s10] sm:$0x1]
        %v1986 = vlaneseq
        %v1987 = vshrl.u32 %v1986, 7
        %v1988 = vsub.s32 0, %v1987
        %v1989 = vrot.slane %v1984, %v1988
        %v2007 = vunpack.c.l.b16 %v1968
        %v2008 = vunpack.c.l.b16 %v1969
        %v2009 = vunpack.c.l.b16 %v1970
        %v2010 = vunpack.c.l.b16 %v1971
        %v2011 = vunpack.c.l.b16 %v1972
        %v2012 = vunpack.c.l.b16 %v1973
        %v2013 = vunpack.c.l.b16 %v1974
        %v2014 = vunpack.c.l.b16 %v1975
        %v2015 = vunpack.c.l.b16 %v1976
        %v2016 = vunpack.c.l.b16 %v1977
        %v2017 = vunpack.c.l.b16 %v1978
        %v2018 = vunpack.c.l.b16 %v1979
        %v2019 = vunpack.c.l.b16 %v1980
        %v2020 = vunpack.c.l.b16 %v1981
        %v2021 = vunpack.c.l.b16 %v1982
        %v2022 = vunpack.c.l.b16 %v1983
        %v2023 = vpack.c.b16 %v2008, %v2007
        %v2024 = vpack.c.b16 %v2010, %v2009
        %v2025 = vpack.c.b16 %v2012, %v2011
        %v2026 = vpack.c.b16 %v2014, %v2013
        %v2027 = vpack.c.b16 %v2016, %v2015
        %v2028 = vpack.c.b16 %v2018, %v2017
        %v2029 = vpack.c.b16 %v2020, %v2019
        %v2030 = vpack.c.b16 %v2022, %v2021
        %2039 = vmatprep.subr.bf16.mxu0 0
        %2040 = vmatpush1.bf16.msra.mxu0 %v2030
        %2041 = vmatprep.subr.bf16.mxu0 0
        %2042 = vmatpush1.bf16.msra.mxu0 %v2029
        %2043 = vmatprep.subr.bf16.mxu0 0
        %2044 = vmatpush1.bf16.msra.mxu0 %v2028
        %2045 = vmatprep.subr.bf16.mxu0 0
        %2046 = vmatpush1.bf16.msra.mxu0 %v2027
        %2047 = vmatprep.subr.bf16.mxu0 0
        %2048 = vmatpush1.bf16.msra.mxu0 %v2026
        %2049 = vmatprep.subr.bf16.mxu0 0
        %2050 = vmatpush1.bf16.msra.mxu0 %v2025
        %2051 = vmatprep.subr.bf16.mxu0 0
        %2052 = vmatpush1.bf16.msra.mxu0 %v2024
        %2053 = vmatprep.subr.bf16.mxu0 0
        %2054 = vmatpush1.bf16.msra.mxu0 %v2023
        %2055 = vmatprep.subr.bf16.mxu0 0
        %2056 = vmatpush2.bf16.msra.mxu0 0
        %2057 = vmatprep.subr.bf16.mxu0 0
        %2058 = vmatpush2.bf16.msra.mxu0 0
        %2059 = vmatprep.subr.bf16.mxu0 0
        %2060 = vmatpush2.bf16.msra.mxu0 0
        %2061 = vmatprep.subr.bf16.mxu0 0
        %2062 = vmatpush2.bf16.msra.mxu0 0
        %2063 = vmatprep.subr.bf16.mxu0 0
        %2064 = vmatpush2.bf16.msra.mxu0 0
        %2065 = vmatprep.subr.bf16.mxu0 0
        %2066 = vmatpush2.bf16.msra.mxu0 0
        %2067 = vmatprep.subr.bf16.mxu0 0
        %2068 = vmatpush2.bf16.msra.mxu0 0
        %2069 = vmatprep.subr.bf16.mxu0 0
        %2070 = vmatpush2.bf16.msra.mxu0 0
        %2071 = vmatprep.mubr.bf16.mxu0 0
        %2072 = vmatmul.mubr.bf16.gmra.mxu0 %v1465
        %v2073 = vpop.f32.mrf.mxu0
        %v2074 = vadd.f32 %v1989, %v2073
        %v2075 = vpop.f32.mrf.mxu0
        %v2076 = vpop.f32.mrf.mxu0
        %v2077 = vadd.f32 %v1989, %v2076
        %v2078 = vpop.f32.mrf.mxu0
        %2079 = vmatprep.mubr.bf16.mxu0 0
        %2080 = vmatmul.mubr.bf16.gmra.mxu0 %v1966
        %v2081 = vpop.f32.mrf.mxu0
        %v2082 = vadd.f32 %v1989, %v2081
        %v2083 = vpop.f32.mrf.mxu0
        %v2084 = vpop.f32.mrf.mxu0
        %v2085 = vadd.f32 %v1989, %v2084
        %v2086 = vpop.f32.mrf.mxu0
        %2087 = vdwg.mxu0
        %2088 = vst [vmem:[%s542] sm:$0xff] %v2074
        %2089 = vst [vmem:[%s542 + $0x8] sm:$0xff] %v2077
        %2090 = vst [vmem:[%s542 + $0x10] sm:$0xff] %v2082
        %2091 = vst [vmem:[%s542 + $0x18] sm:$0xff] %v2085
        %s2092 = sand.u32 %s287, 1
        %s2093 = scalar_lea.sflag [#allocation4], %s2092
        %s2094 = sand.u32 %s287, 1
        %s2095 = smul.addr %s2094, 32
        %s2096 = scalar_lea.vmem [#allocation14], %s2095
        // Predicated region
        $region93: #{tpu_custom_call.1} parent=63 // pred_check
          %p2097 = pneg %p297
        $region94: #{tpu_custom_call.1} parent=63 // pred_check_branch
          %2099 = sbr.rel (%p2097) target = $region96
        $region95: #{tpu_custom_call.1} parent=63 // pred_region
          %s2100 = smul.u32 2, %s33
          %s2102 = ssub.s32 512, 512
          %2103 = vsyncadd %s2093, %s2102
          %s2104 = smul.addr %s2100, 2
          %s2105 = smul.addr %s2104, 128
          %s2106 = scalar_lea.hbm %s11, %s2105
          %s2107 = sshll.u32 %s2096, 4
          %s2108 = int_to_ptr.vmem [resolvable:$true] %s2107
          %2113 = dma.vmem_to_hbm [thread:$0]  %s2108, 512, %s2106, %s2093, 128, 128, 8
        $region96: #{tpu_custom_call.1} parent=63 // pred_fallthru
          _
      $region64: #{tpu_custom_call.1} parent=5 // pred_fallthru
        _
      %p2114 = scmp.le.s32.totalorder 2, %s28
      // Predicated region
      $region97: #{tpu_custom_call.1} parent=5 // pred_check
        %p2115 = pneg %p2114
      $region98: #{tpu_custom_call.1} parent=5 // pred_check_branch
        %2117 = sbr.rel (%p2115) target = $region100
      $region99: #{tpu_custom_call.1} parent=5 // pred_region
        %s2118 = ssub.s32 %s28, 2
        // Predicated region
        $region101: #{tpu_custom_call.1} parent=99 // pred_check
          %p2119 = pneg %p303
        $region102: #{tpu_custom_call.1} parent=99 // pred_check_branch
          %2121 = sbr.rel (%p2119) target = $region104
        $region103: #{tpu_custom_call.1} parent=99 // pred_region
          %s2122 = sand.u32 %s288, 1
          %s2123 = scalar_lea.sflag [#allocation4], %s2122
          %s2124 = sand.u32 %s288, 1
          %s2125 = smul.addr %s2124, 32
          %s2126 = scalar_lea.vmem [#allocation14], %s2125
          %2127 = dma.done %s2123, 512
        $region104: #{tpu_custom_call.1} parent=99 // pred_fallthru
          _
      $region100: #{tpu_custom_call.1} parent=5 // pred_fallthru
        _
    $region6: #{tpu_custom_call.1} parent=1 // loop_footer
      %s32 = sadd.s32 1, %s28
    $region7: #{tpu_custom_call.1} parent=1 // loop_footer_branch
      %27 = sbr.rel target = $region3
    $region8: #{tpu_custom_call.1} parent=1 // loop_exit
      _
    %2128 = vsyncpa [#allocation3], 1
    %s2129 = scalar_lea.sflag [#allocation3], 1
    %2130 = vsyncpa %s2129, 1
    %2131 = vsyncpa [#allocation6], 1
    %s2132 = scalar_lea.sflag [#allocation6], 1
    %2133 = vsyncpa %s2132, 1
    %2134 = vsyncpa [#allocation9], 1
    %2135 = vsyncpa [#allocation12], 1
    %2136 = vsyncpa [#allocation4], 1
    %s2137 = scalar_lea.sflag [#allocation4], 1
    %2138 = vsyncpa %s2137, 1

</llo_original>
